<compile_context>
chip_gen: v7x
topology: tpu7x:2x2x1
jax: 0.10.0
libtpu: 0.0.40
codegen_flags: <defaults>
</compile_context>

<pallas_src>
import functools

import jax
import jax.numpy as jnp
import numpy as np
from jax.experimental import pallas as pl
from jax.experimental.pallas import tpu as pltpu


def _ln(x, eps):
    """No-affine LayerNorm, use_fast_variance=False semantics (f32)."""
    mu = jnp.mean(x, axis=-1, keepdims=True)
    var = jnp.mean(jnp.square(x - mu), axis=-1, keepdims=True)
    return (x - mu) * jax.lax.rsqrt(var + eps)


def _adaptive_ln_kernel(x_ref, sc_ref, w_ref, b_ref, out_ref, *, C, eps):
    x = x_ref[...].astype(jnp.float32)        # (T, C)   upcast after load
    sc = sc_ref[...].astype(jnp.float32)      # (T, Cs)
    xn = _ln(x, eps)                          # no-affine LN of x
    scn = _ln(sc, eps)                        # gamma is folded into w_ref
    # Fused (scale | bias) projection, f32 operands / f32 accumulation; the
    # kernel is HBM-bound so the slower f32 MXU path is free wall-clock-wise.
    proj = jnp.dot(scn, w_ref[...], preferred_element_type=jnp.float32)  # (T, 2C)
    scale = proj[:, :C] + b_ref[...]          # 128-aligned static slices (views)
    bias = proj[:, C:]
    out_ref[...] = (jax.nn.sigmoid(scale) * xn + bias).astype(out_ref.dtype)


def _plain_ln_kernel(x_ref, out_ref, *, eps):
    out_ref[...] = _ln(x_ref[...].astype(jnp.float32), eps).astype(out_ref.dtype)


def prepare_adaptive_ln_params(params):
    """One-time parameter prep (hoisted out of the per-forward hot path).

    Folds the single_cond LayerNorm scale (gamma) into the scale/bias Linear
    weights -- (scn*gamma)W == scn (diag(gamma) W) -- and fuses the two Linears
    that share the same LHS into a single (Cs, 2C) f32 weight.
    """
    gamma = params["sc_ln_scale"].astype(jnp.float32).reshape(-1, 1)     # (Cs, 1)
    w_fused = jnp.concatenate(
        [gamma * params["scale_w"].astype(jnp.float32),
         gamma * params["bias_w"].astype(jnp.float32)], axis=-1)         # (Cs, 2C)
    b_scale = params["scale_b"].astype(jnp.float32).reshape(1, -1)       # (1, C)
    return {"w_fused": w_fused, "b_scale": b_scale}


def _round_up(x, m):
    return ((x + m - 1) // m) * m


def _select_tile_n(N):
    try:
        vmem_cap = pltpu.get_tpu_info().vmem_capacity_bytes
    except Exception:  # conservative fallback: assume the smaller (v7x) VMEM
        vmem_cap = 64 * 1024 * 1024
    # Bigger tiles amortize per-grid-step overhead (~85% of HBM roofline at
    # 512-1024 rows); cap lower on 64 MiB-VMEM parts (v7x).
    target = 512 if vmem_cap <= 64 * 1024 * 1024 else 1024
    # Keep >= 2 row-balanced grid steps so the "parallel" axis splits across
    # v7x's two TensorCores; multiple of 16 covers bf16 sublane packing.
    return max(16, min(target, _round_up(pl.cdiv(N, 2), 16)))


def _vmem_limit_bytes(tile_n, C, Cs, x_bytes, sc_bytes):
    # Double-buffered x / single_cond / out blocks, (at most) double-buffered
    # constant weight + bias, plus f32 live intermediates (xn, scn, proj, out).
    pipelined = 2 * tile_n * (C * x_bytes + Cs * sc_bytes + C * x_bytes)
    consts = 2 * (Cs * 2 * C * 4 + C * 4)
    temps = tile_n * (C + Cs + 2 * C + C) * 4
    need = pipelined + consts + temps
    # 2x headroom for compiler temporaries; stay under v7x's 64 MiB VMEM.
    return int(min(60 * 1024 * 1024, max(16 * 1024 * 1024, 2 * need)))


def adaptive_layer_norm(x, single_cond, prepped_params=None, *, tile_n=None,
                        eps=1e-5):
    """Pallas forward of AdaptiveLayerNorm (use_single_cond construction).

    `prepped_params` is the output of prepare_adaptive_ln_params() (ignored for
    the single_cond=None path).  Inputs are consumed in their native dtype and
    the output has x.dtype; all statistics/compute are f32 inside the kernel.
    """
    orig_shape = x.shape
    C = orig_shape[-1]
    N = int(np.prod(orig_shape[:-1]))
    x2 = x.reshape(N, C)                         # layout no-op, no dtype cast
    out_dtype = x.dtype
    xb = jnp.dtype(x.dtype).itemsize

    if single_cond is None:
        # TODO(synk): the use_single_cond=False construction (named variants)
        # has a learned scale/offset on this LayerNorm; the default
        # construction (name='') only hits this branch with the plain
        # no-affine LayerNorm implemented here.
        if tile_n is None:
            tile_n = _select_tile_n(N)
        n_tiles = pl.cdiv(N, tile_n)
        out = pl.pallas_call(
            functools.partial(_plain_ln_kernel, eps=eps),
            out_shape=jax.ShapeDtypeStruct((N, C), out_dtype),
            grid=(n_tiles,),
            in_specs=[pl.BlockSpec((tile_n, C), lambda i: (i, 0))],
            out_specs=pl.BlockSpec((tile_n, C), lambda i: (i, 0)),
            compiler_params=pltpu.CompilerParams(
                dimension_semantics=("parallel",),
                vmem_limit_bytes=_vmem_limit_bytes(tile_n, C, 0, xb, 0)),
        )(x2)
        return out.reshape(orig_shape)

    Cs = single_cond.shape[-1]
    sc2 = single_cond.reshape(N, Cs)
    scb = jnp.dtype(single_cond.dtype).itemsize
    if tile_n is None:
        tile_n = _select_tile_n(N)
    n_tiles = pl.cdiv(N, tile_n)

    w_fused = prepped_params["w_fused"]          # (Cs, 2C) f32, gamma folded in
    b_scale = prepped_params["b_scale"]          # (1, C)   f32

    out = pl.pallas_call(
        functools.partial(_adaptive_ln_kernel, C=C, eps=eps),
        out_shape=jax.ShapeDtypeStruct((N, C), out_dtype),
        grid=(n_tiles,),
        in_specs=[
            pl.BlockSpec((tile_n, C), lambda i: (i, 0)),    # x rows
            pl.BlockSpec((tile_n, Cs), lambda i: (i, 0)),   # single_cond rows
            pl.BlockSpec((Cs, 2 * C), lambda i: (0, 0)),    # fused weight (fetched once)
            pl.BlockSpec((1, C), lambda i: (0, 0)),         # scale bias  (fetched once)
        ],
        out_specs=pl.BlockSpec((tile_n, C), lambda i: (i, 0)),
        compiler_params=pltpu.CompilerParams(
            dimension_semantics=("parallel",),
            vmem_limit_bytes=_vmem_limit_bytes(tile_n, C, Cs, xb, scb)),
    )(x2, sc2, w_fused, b_scale)
    return out.reshape(orig_shape)


def ref_adaptive_layer_norm(x, single_cond, params, eps=1e-5):
    """Pure-JAX reference mirroring the PyTorch forward semantics (f32)."""
    xn = _ln(x.astype(jnp.float32), eps)
    if single_cond is None:
        return xn
    scn = _ln(single_cond.astype(jnp.float32), eps) * params["sc_ln_scale"]
    scale = scn @ params["scale_w"] + params["scale_b"]
    bias = scn @ params["bias_w"]
    return jax.nn.sigmoid(scale) * xn + bias


if __name__ == "__main__":
    # Small test shapes; N = B*T = 400 rows, C = Cs = 128 (lane-dense).
    B, T, C, Cs = 2, 200, 128, 128

    key = jax.random.PRNGKey(0)
    k1, k2, k3, k4, k5, k6 = jax.random.split(key, 6)
    # bf16 activations (the model dtype) -> half the HBM traffic of f32 I/O.
    x_bf16 = jax.random.normal(k1, (B, T, C), jnp.float32).astype(jnp.bfloat16)
    sc_bf16 = jax.random.normal(k2, (B, T, Cs), jnp.float32).astype(jnp.bfloat16)
    params = {
        "sc_ln_scale": 1.0 + 0.1 * jax.random.normal(k3, (Cs,), jnp.float32),
        "scale_w": jax.random.normal(k4, (Cs, C), jnp.float32) * Cs ** -0.5,
        "scale_b": 0.1 * jax.random.normal(k5, (C,), jnp.float32),
        "bias_w": jax.random.normal(k6, (Cs, C), jnp.float32) * Cs ** -0.5,
    }
    prepped = prepare_adaptive_ln_params(params)   # one-time, outside hot path

    ref = ref_adaptive_layer_norm(x_bf16, sc_bf16, params)

    # Adaptive path, bf16 I/O (auto tile; 400 rows -> 2 tiles of 208, second
    # partially masked).  Tolerance is a conservative bound covering bf16
    # output quantization + MXU matmul rounding modes; typical agreement is
    # much tighter.
    out_bf16 = adaptive_layer_norm(x_bf16, sc_bf16, prepped)
    out_bf16 = jax.block_until_ready(out_bf16)
    np.testing.assert_allclose(np.asarray(out_bf16, dtype=np.float32),
                               np.asarray(ref), rtol=2.5e-2, atol=2.5e-2)

    # Adaptive path, f32 I/O, forced ragged grid (tile_n=384 over 400 rows)
    # to explicitly exercise the masked partial last block.
    x_f32 = x_bf16.astype(jnp.float32)
    sc_f32 = sc_bf16.astype(jnp.float32)
    out_f32 = adaptive_layer_norm(x_f32, sc_f32, prepped, tile_n=384)
    out_f32 = jax.block_until_ready(out_f32)
    np.testing.assert_allclose(np.asarray(out_f32), np.asarray(ref),
                               rtol=2e-2, atol=2e-2)

    # Plain path (single_cond=None): pure no-affine LayerNorm, f32, tight tol.
    out_plain = adaptive_layer_norm(x_f32, None)
    out_plain = jax.block_until_ready(out_plain)
    ref_plain = ref_adaptive_layer_norm(x_f32, None, params)
    np.testing.assert_allclose(np.asarray(out_plain), np.asarray(ref_plain),
                               rtol=1e-5, atol=1e-5)

    print("KERNEL_OK")
</pallas_src>

<mosaic_0001>
module attributes {stable_mosaic.version = 11 : i64} {
  func.func @_adaptive_ln_kernel(%arg0: i32, %arg1: memref<208x128xbf16, #tpu.memory_space<vmem>>, %arg2: memref<208x128xbf16, #tpu.memory_space<vmem>>, %arg3: memref<128x256xf32, #tpu.memory_space<vmem>>, %arg4: memref<1x128xf32, #tpu.memory_space<vmem>>, %arg5: memref<208x128xbf16, #tpu.memory_space<vmem>>) attributes {dimension_semantics = [#tpu.dimension_semantics<parallel>], iteration_bounds = array<i64: 2>, scalar_prefetch = 0 : i64, scratch_operands = 0 : i64, tpu.core_type = #tpu.core_type<tc>, window_params = [{transform_indices = @transform_0, window_bounds = array<i64: 208, 128>}, {transform_indices = @transform_1, window_bounds = array<i64: 208, 128>}, {pipeline_mode = #tpu.pipeline_mode<synchronous>, transform_indices = @transform_2, window_bounds = array<i64: 128, 256>}, {pipeline_mode = #tpu.pipeline_mode<synchronous>, transform_indices = @transform_3, window_bounds = array<i64: 1, 128>}, {transform_indices = @transform_4, window_bounds = array<i64: 208, 128>}]} {
    %c0 = arith.constant 0 : index
    %c0_0 = arith.constant 0 : index
    %0 = vector.load %arg1[%c0, %c0_0] : memref<208x128xbf16, #tpu.memory_space<vmem>>, vector<208x128xbf16>
    %1 = arith.extf %0 : vector<208x128xbf16> to vector<208x128xf32>
    %c0_1 = arith.constant 0 : index
    %c0_2 = arith.constant 0 : index
    %2 = vector.load %arg2[%c0_1, %c0_2] : memref<208x128xbf16, #tpu.memory_space<vmem>>, vector<208x128xbf16>
    %3 = arith.extf %2 : vector<208x128xbf16> to vector<208x128xf32>
    %cst = arith.constant dense<0.000000e+00> : vector<208xf32>
    %4 = vector.multi_reduction <add>, %1, %cst [1] : vector<208x128xf32> to vector<208xf32>
    %5 = vector.shape_cast %4 : vector<208xf32> to vector<208x1xf32>
    %cst_3 = arith.constant 1.280000e+02 : f32
    %6 = vector.broadcast %cst_3 : f32 to vector<208x1xf32>
    %7 = arith.divf %5, %6 : vector<208x1xf32>
    %8 = vector.broadcast %7 : vector<208x1xf32> to vector<208x128xf32>
    %9 = arith.subf %1, %8 : vector<208x128xf32>
    %10 = arith.mulf %9, %9 : vector<208x128xf32>
    %cst_4 = arith.constant dense<0.000000e+00> : vector<208xf32>
    %11 = vector.multi_reduction <add>, %10, %cst_4 [1] : vector<208x128xf32> to vector<208xf32>
    %12 = vector.shape_cast %11 : vector<208xf32> to vector<208x1xf32>
    %cst_5 = arith.constant 1.280000e+02 : f32
    %13 = vector.broadcast %cst_5 : f32 to vector<208x1xf32>
    %14 = arith.divf %12, %13 : vector<208x1xf32>
    %15 = vector.broadcast %7 : vector<208x1xf32> to vector<208x128xf32>
    %16 = arith.subf %1, %15 : vector<208x128xf32>
    %cst_6 = arith.constant 9.99999974E-6 : f32
    %17 = vector.broadcast %cst_6 : f32 to vector<208x1xf32>
    %18 = arith.addf %14, %17 : vector<208x1xf32>
    %19 = math.rsqrt %18 : vector<208x1xf32>
    %20 = vector.broadcast %19 : vector<208x1xf32> to vector<208x128xf32>
    %21 = arith.mulf %16, %20 : vector<208x128xf32>
    %cst_7 = arith.constant dense<0.000000e+00> : vector<208xf32>
    %22 = vector.multi_reduction <add>, %3, %cst_7 [1] : vector<208x128xf32> to vector<208xf32>
    %23 = vector.shape_cast %22 : vector<208xf32> to vector<208x1xf32>
    %cst_8 = arith.constant 1.280000e+02 : f32
    %24 = vector.broadcast %cst_8 : f32 to vector<208x1xf32>
    %25 = arith.divf %23, %24 : vector<208x1xf32>
    %26 = vector.broadcast %25 : vector<208x1xf32> to vector<208x128xf32>
    %27 = arith.subf %3, %26 : vector<208x128xf32>
    %28 = arith.mulf %27, %27 : vector<208x128xf32>
    %cst_9 = arith.constant dense<0.000000e+00> : vector<208xf32>
    %29 = vector.multi_reduction <add>, %28, %cst_9 [1] : vector<208x128xf32> to vector<208xf32>
    %30 = vector.shape_cast %29 : vector<208xf32> to vector<208x1xf32>
    %cst_10 = arith.constant 1.280000e+02 : f32
    %31 = vector.broadcast %cst_10 : f32 to vector<208x1xf32>
    %32 = arith.divf %30, %31 : vector<208x1xf32>
    %33 = vector.broadcast %25 : vector<208x1xf32> to vector<208x128xf32>
    %34 = arith.subf %3, %33 : vector<208x128xf32>
    %cst_11 = arith.constant 9.99999974E-6 : f32
    %35 = vector.broadcast %cst_11 : f32 to vector<208x1xf32>
    %36 = arith.addf %32, %35 : vector<208x1xf32>
    %37 = math.rsqrt %36 : vector<208x1xf32>
    %38 = vector.broadcast %37 : vector<208x1xf32> to vector<208x128xf32>
    %39 = arith.mulf %34, %38 : vector<208x128xf32>
    %c0_12 = arith.constant 0 : index
    %c0_13 = arith.constant 0 : index
    %40 = vector.load %arg3[%c0_12, %c0_13] : memref<128x256xf32, #tpu.memory_space<vmem>>, vector<128x256xf32>
    %cst_14 = arith.constant dense<0.000000e+00> : vector<208x256xf32>
    %41 = tpu.matmul %39, %40, %cst_14 {dimension_numbers = #tpu.dot_dimension_numbers<[1], [0], [0], [1], [0, 0, 1, 1], [], []>} : vector<208x128xf32>, vector<128x256xf32>, vector<208x256xf32> -> vector<208x256xf32>
    %42 = vector.extract_strided_slice %41 {offsets = [0, 0], sizes = [208, 128], strides = [1, 1]} : vector<208x256xf32> to vector<208x128xf32>
    %c0_15 = arith.constant 0 : index
    %c0_16 = arith.constant 0 : index
    %43 = vector.load %arg4[%c0_15, %c0_16] : memref<1x128xf32, #tpu.memory_space<vmem>>, vector<1x128xf32>
    %44 = vector.broadcast %43 : vector<1x128xf32> to vector<208x128xf32>
    %45 = arith.addf %42, %44 : vector<208x128xf32>
    %46 = vector.extract_strided_slice %41 {offsets = [0, 128], sizes = [208, 128], strides = [1, 1]} : vector<208x256xf32> to vector<208x128xf32>
    %47 = arith.negf %45 : vector<208x128xf32>
    %48 = math.exp %47 : vector<208x128xf32>
    %cst_17 = arith.constant 1.000000e+00 : f32
    %49 = vector.broadcast %cst_17 : f32 to vector<208x128xf32>
    %50 = arith.addf %49, %48 : vector<208x128xf32>
    %51 = arith.divf %49, %50 : vector<208x128xf32>
    %52 = arith.mulf %51, %21 : vector<208x128xf32>
    %53 = arith.addf %52, %46 : vector<208x128xf32>
    %54 = arith.truncf %53 : vector<208x128xf32> to vector<208x128xbf16>
    %c0_18 = arith.constant 0 : index
    %c0_19 = arith.constant 0 : index
    %55 = vector.load %arg5[%c0_18, %c0_19] : memref<208x128xbf16, #tpu.memory_space<vmem>>, vector<208x128xbf16>
    tpu.vector_store %arg5[%c0_18, %c0_19], %54 {strides = array<i32>} : memref<208x128xbf16, #tpu.memory_space<vmem>>, vector<208x128xbf16>,
    return
  }
  func.func @transform_0(%arg0: i32) -> (i32, i32) {
    %c0_i32 = arith.constant 0 : i32
    %c0_i32_0 = arith.constant 0 : i32
    return %arg0, %c0_i32 : i32, i32
  }
  func.func @transform_1(%arg0: i32) -> (i32, i32) {
    %c0_i32 = arith.constant 0 : i32
    %c0_i32_0 = arith.constant 0 : i32
    return %arg0, %c0_i32 : i32, i32
  }
  func.func @transform_2(%arg0: i32) -> (i32, i32) {
    %c0_i32 = arith.constant 0 : i32
    %c0_i32_0 = arith.constant 0 : i32
    %c0_i32_1 = arith.constant 0 : i32
    return %c0_i32, %c0_i32_0 : i32, i32
  }
  func.func @transform_3(%arg0: i32) -> (i32, i32) {
    %c0_i32 = arith.constant 0 : i32
    %c0_i32_0 = arith.constant 0 : i32
    %c0_i32_1 = arith.constant 0 : i32
    return %c0_i32, %c0_i32_0 : i32, i32
  }
  func.func @transform_4(%arg0: i32) -> (i32, i32) {
    %c0_i32 = arith.constant 0 : i32
    %c0_i32_0 = arith.constant 0 : i32
    return %arg0, %c0_i32 : i32, i32
  }
}

</mosaic_0001>

<llo_original>
// kernel: tpu_custom_call.1
$region0: #{tpu_custom_call.1}
  #allocation0 [shape = 'u32[]', space=smem, size = 0x4, offset = 0x4, fixed_abs, tag = 'smem constant byte address 0x4 - core index']
  #allocation1 [shape = 'u32[144,128]{1,0:T(1,128)}', space=vmem, size = 0x12000, scoped, tag = 'internal scratch']
  %s0 = inlined_call_operand.hbm [shape: bf16[400,128], index: 0, kind: input, shape index: {}]
  %s1 = inlined_call_operand.hbm [shape: bf16[400,128], index: 1, kind: input, shape index: {}]
  %s2 = inlined_call_operand.hbm [shape: f32[128,256], index: 2, kind: input, shape index: {}]
  %s3 = inlined_call_operand.vmem [shape: f32[1,128], index: 3, kind: input, shape index: {}]
  %s4 = inlined_call_operand.hbm [shape: bf16[400,128], index: 4, kind: output, shape index: {}]
  %s5 = sld [smem:[#allocation0]]
  $region61: #{tpu_custom_call.1} parent=0
    _
  %s7 = ssub.s32 1, %s5
  %s8 = scalar_select 0, %s7, %s5
  $region1: #{tpu_custom_call.1} parent=0
    #allocation2 [shape = 'u8[106496]{0}', space=vmem, size = 0x1a000, scoped, tag = 'input window, operand 0']
    #allocation3 [shape = 's32[2]{0}', space=sflag, size = 0x8, scoped, tag = 'scoped memory for tpu_custom_call.1']
    #allocation4 [shape = 's32[2]{0}', space=sflag, size = 0x8, scoped, tag = 'scoped memory for tpu_custom_call.1']
    #allocation5 [shape = 'u8[106496]{0}', space=vmem, size = 0x1a000, scoped, tag = 'input window, operand 1']
    #allocation6 [shape = 's32[2]{0}', space=sflag, size = 0x8, scoped, tag = 'scoped memory for tpu_custom_call.1']
    #allocation7 [shape = 'u8[131072]{0}', space=vmem, size = 0x20000, scoped, tag = 'input window, operand 2, single buffered']
    #allocation8 [shape = 'u8[106496]{0}', space=vmem, size = 0x1a000, scoped, tag = 'output window, operand 0']
    %9 = vsyncpa [#allocation3], 0
    %s10 = scalar_lea.sflag [#allocation3], 1
    %11 = vsyncpa %s10, 0
    %12 = vsyncpa [#allocation6], 0
    %s13 = scalar_lea.sflag [#allocation6], 1
    %14 = vsyncpa %s13, 0
    %15 = vsyncpa [#allocation4], 0
    %s16 = scalar_lea.sflag [#allocation4], 1
    %17 = vsyncpa %s16, 0
    loop: start=0, step=1, limit=4
    $region2: #{tpu_custom_call.1} parent=1 // loop_pre_header
      _
    $region3: #{tpu_custom_call.1} parent=1 // loop_header
      %s19 = sphi 0, %s23
      %p20 = scmp.ge.s32.totalorder %s19, 4
      %s29 = sphi 0, %s31
      %s32 = sphi 0, %s29
      %s33 = sphi 0, %s32
      %s49 = sphi 0, %s33
      %s55 = sphi 0, %s57
      %s58 = sphi 0, %s55
      %s59 = sphi 0, %s58
      %s75 = sphi 0, %s59
      %s79 = sphi 0, %s79
      %s81 = sphi 0, %s79
      %s82 = sphi 0, %s81
      %s96 = sphi 0, %s82
      %s100 = sphi 0, %s100
      %s102 = sphi 0, %s100
      %s103 = sphi 0, %s102
      %s117 = sphi 0, %s103
      %s123 = sphi 0, %s125
      %s126 = sphi 0, %s123
      %s127 = sphi 0, %s126
      %s143 = sphi 0, %s127
    $region4: #{tpu_custom_call.1} parent=1 // loop_header_branch
      %22 = sbr.rel (%p20) target = $region8
    $region5: #{tpu_custom_call.1} parent=1 // loop_body
      %s24 = ssub.s32 %s19, 1
      %s25 = ssub.s32 %s19, 2
      %s26 = sadd.s32 %s19, 1
      %s27 = ssub.s32 %s19, %s26
      %p28 = scmp.eq.s32.totalorder %s27, 0
      %s30 = sadd.s32 %s29, 1
      %s31 = scalar_select %p28, %s29, %s30
      %p34 = pneg %p28
      %p35 = scmp.eq.s32.totalorder %s19, 1
      %p36 = por %p34, %p35
      %p37 = scmp.ne.s32.totalorder %s29, %s32
      %p38 = scmp.eq.s32.totalorder %s19, 0
      %p39 = por %p37, %p38
      %p40 = scmp.ne.s32.totalorder %s29, %s32
      %p41 = scmp.eq.s32.totalorder %s24, 1
      %p42 = por %p40, %p41
      %p43 = scmp.ne.s32.totalorder %s32, %s33
      %p44 = scmp.eq.s32.totalorder %s24, 0
      %p45 = por %p43, %p44
      %p46 = scmp.ne.s32.totalorder %s32, %s33
      %p47 = scmp.eq.s32.totalorder %s25, 1
      %p48 = por %p46, %p47
      %p50 = scmp.ne.s32.totalorder %s33, %s49
      %p51 = scmp.eq.s32.totalorder %s25, 0
      %p52 = por %p50, %p51
      %s53 = ssub.s32 %s19, %s26
      %p54 = scmp.eq.s32.totalorder %s53, 0
      %s56 = sadd.s32 %s55, 1
      %s57 = scalar_select %p54, %s55, %s56
      %p60 = pneg %p54
      %p61 = scmp.eq.s32.totalorder %s19, 1
      %p62 = por %p60, %p61
      %p63 = scmp.ne.s32.totalorder %s55, %s58
      %p64 = scmp.eq.s32.totalorder %s19, 0
      %p65 = por %p63, %p64
      %p66 = scmp.ne.s32.totalorder %s55, %s58
      %p67 = scmp.eq.s32.totalorder %s24, 1
      %p68 = por %p66, %p67
      %p69 = scmp.ne.s32.totalorder %s58, %s59
      %p70 = scmp.eq.s32.totalorder %s24, 0
      %p71 = por %p69, %p70
      %p72 = scmp.ne.s32.totalorder %s58, %s59
      %p73 = scmp.eq.s32.totalorder %s25, 1
      %p74 = por %p72, %p73
      %p76 = scmp.ne.s32.totalorder %s59, %s75
      %p77 = scmp.eq.s32.totalorder %s25, 0
      %p78 = por %p76, %p77
      %s80 = sadd.s32 %s79, 1
      %p83 = scmp.eq.s32.totalorder %s19, 1
      %p84 = scmp.ne.s32.totalorder %s79, %s81
      %p85 = scmp.eq.s32.totalorder %s19, 0
      %p86 = por %p84, %p85
      %p87 = scmp.ne.s32.totalorder %s79, %s81
      %p88 = scmp.eq.s32.totalorder %s24, 1
      %p89 = por %p87, %p88
      %p90 = scmp.ne.s32.totalorder %s81, %s82
      %p91 = scmp.eq.s32.totalorder %s24, 0
      %p92 = por %p90, %p91
      %p93 = scmp.ne.s32.totalorder %s81, %s82
      %p94 = scmp.eq.s32.totalorder %s25, 1
      %p95 = por %p93, %p94
      %p97 = scmp.ne.s32.totalorder %s82, %s96
      %p98 = scmp.eq.s32.totalorder %s25, 0
      %p99 = por %p97, %p98
      %s101 = sadd.s32 %s100, 1
      %p104 = scmp.eq.s32.totalorder %s19, 1
      %p105 = scmp.ne.s32.totalorder %s100, %s102
      %p106 = scmp.eq.s32.totalorder %s19, 0
      %p107 = por %p105, %p106
      %p108 = scmp.ne.s32.totalorder %s100, %s102
      %p109 = scmp.eq.s32.totalorder %s24, 1
      %p110 = por %p108, %p109
      %p111 = scmp.ne.s32.totalorder %s102, %s103
      %p112 = scmp.eq.s32.totalorder %s24, 0
      %p113 = por %p111, %p112
      %p114 = scmp.ne.s32.totalorder %s102, %s103
      %p115 = scmp.eq.s32.totalorder %s25, 1
      %p116 = por %p114, %p115
      %p118 = scmp.ne.s32.totalorder %s103, %s117
      %p119 = scmp.eq.s32.totalorder %s25, 0
      %p120 = por %p118, %p119
      %s121 = ssub.s32 %s19, %s26
      %p122 = scmp.eq.s32.totalorder %s121, 0
      %s124 = sadd.s32 %s123, 1
      %s125 = scalar_select %p122, %s123, %s124
      %p128 = pneg %p122
      %p129 = scmp.eq.s32.totalorder %s19, 1
      %p130 = por %p128, %p129
      %p131 = scmp.ne.s32.totalorder %s123, %s126
      %p132 = scmp.eq.s32.totalorder %s19, 0
      %p133 = por %p131, %p132
      %p134 = scmp.ne.s32.totalorder %s123, %s126
      %p135 = scmp.eq.s32.totalorder %s24, 1
      %p136 = por %p134, %p135
      %p137 = scmp.ne.s32.totalorder %s126, %s127
      %p138 = scmp.eq.s32.totalorder %s24, 0
      %p139 = por %p137, %p138
      %p140 = scmp.ne.s32.totalorder %s126, %s127
      %p141 = scmp.eq.s32.totalorder %s25, 1
      %p142 = por %p140, %p141
      %p144 = scmp.ne.s32.totalorder %s127, %s143
      %p145 = scmp.eq.s32.totalorder %s25, 0
      %p146 = por %p144, %p145
      %p147 = scmp.le.s32.totalorder 1, %s19
      %p148 = scmp.lt.s32.totalorder %s19, 3
      %p149 = pnand %p147, %p148
      %p150 = pneg %p149
      // Predicated region
      $region9: #{tpu_custom_call.1} parent=5 // pred_check
        _
      $region10: #{tpu_custom_call.1} parent=5 // pred_check_branch
        %152 = sbr.rel (%p149) target = $region12
      $region11: #{tpu_custom_call.1} parent=5 // pred_region
        %s153 = ssub.s32 %s19, 1
        // Predicated region
        $region13: #{tpu_custom_call.1} parent=11 // pred_check
          %p154 = pneg %p92
        $region14: #{tpu_custom_call.1} parent=11 // pred_check_branch
          %156 = sbr.rel (%p154) target = $region16
        $region15: #{tpu_custom_call.1} parent=11 // pred_region
          %s158 = ssub.s32 4096, 4096
          %159 = vsyncadd [#allocation6], %s158
          %s160 = sshll.u32 [#allocation7], 4
          %s161 = int_to_ptr.vmem [resolvable:$true] %s160
          %166 = dma.hbm_to_vmem [thread:$0]  %s2, 4096, %s161, [#allocation6], 256, 256, 16
        $region16: #{tpu_custom_call.1} parent=11 // pred_fallthru
          _
        // Predicated region
        $region17: #{tpu_custom_call.1} parent=11 // pred_check
          %p167 = pneg %p113
        $region18: #{tpu_custom_call.1} parent=11 // pred_check_branch
          %169 = sbr.rel (%p167) target = $region20
        $region19: #{tpu_custom_call.1} parent=11 // pred_region
          _
        $region20: #{tpu_custom_call.1} parent=11 // pred_fallthru
          _
      $region12: #{tpu_custom_call.1} parent=5 // pred_fallthru
        _
      %p170 = scmp.lt.s32.totalorder %s19, 2
      // Predicated region
      $region21: #{tpu_custom_call.1} parent=5 // pred_check
        %p171 = pneg %p170
      $region22: #{tpu_custom_call.1} parent=5 // pred_check_branch
        %173 = sbr.rel (%p171) target = $region24
      $region23: #{tpu_custom_call.1} parent=5 // pred_region
        // Predicated region
        $region25: #{tpu_custom_call.1} parent=23 // pred_check
          %p174 = pneg %p39
        $region26: #{tpu_custom_call.1} parent=23 // pred_check_branch
          %176 = sbr.rel (%p174) target = $region28
        $region27: #{tpu_custom_call.1} parent=23 // pred_region
          %s177 = sand.u32 %s29, 1
          %s178 = scalar_lea.sflag [#allocation3], %s177
          %s179 = sand.u32 %s29, 1
          %s180 = smul.addr %s179, 104
          %s181 = scalar_lea.vmem [#allocation2], %s180
          %s182 = smul.u32 26, %s19
          %s183 = ssub.s32 50, %s182
          %p184 = scmp.lt.s32.totalorder %s183, 26
          %s185 = scalar_select %p184, %s183, 26
          %s186 = smul.u32 64, %s185
          %s188 = ssub.s32 1664, %s186
          %189 = vsyncadd %s178, %s188
          %p190 = scmp.ne.s32.totalorder 0, %s186
          %s191 = smul.addr %s182, 64
          %s192 = scalar_lea.hbm %s0, %s191
          %s193 = smul.u32 4, %s185
          %s194 = sshll.u32 %s181, 4
          %s195 = int_to_ptr.vmem [resolvable:$true] %s194
          %s196 = sshll.u32 %s193, 4
          %200 = dma.hbm_to_vmem [thread:$0]  (%p190), %s192, %s196, %s195, %s178, 64, 64, 4
        $region28: #{tpu_custom_call.1} parent=23 // pred_fallthru
          _
        // Predicated region
        $region29: #{tpu_custom_call.1} parent=23 // pred_check
          %p201 = pneg %p65
        $region30: #{tpu_custom_call.1} parent=23 // pred_check_branch
          %203 = sbr.rel (%p201) target = $region32
        $region31: #{tpu_custom_call.1} parent=23 // pred_region
          %s204 = sand.u32 %s19, 1
          %s205 = scalar_lea.sflag [#allocation6], %s204
          %s206 = sand.u32 %s55, 1
          %s207 = smul.addr %s206, 104
          %s208 = scalar_lea.vmem [#allocation5], %s207
          %s209 = smul.u32 26, %s19
          %s210 = ssub.s32 50, %s209
          %p211 = scmp.lt.s32.totalorder %s210, 26
          %s212 = scalar_select %p211, %s210, 26
          %s213 = smul.u32 64, %s212
          %s215 = ssub.s32 1664, %s213
          %216 = vsyncadd %s205, %s215
          %p217 = scmp.ne.s32.totalorder 0, %s213
          %s218 = smul.addr %s209, 64
          %s219 = scalar_lea.hbm %s1, %s218
          %s220 = smul.u32 4, %s212
          %s221 = sshll.u32 %s208, 4
          %s222 = int_to_ptr.vmem [resolvable:$true] %s221
          %s223 = sshll.u32 %s220, 4
          %227 = dma.hbm_to_vmem [thread:$0]  (%p217), %s219, %s223, %s222, %s205, 64, 64, 4
        $region32: #{tpu_custom_call.1} parent=23 // pred_fallthru
          _
      $region24: #{tpu_custom_call.1} parent=5 // pred_fallthru
        _
      %p228 = scmp.le.s32.totalorder 1, %s19
      %p229 = scmp.lt.s32.totalorder %s19, 3
      %p230 = pnand %p228, %p229
      %p231 = pneg %p230
      // Predicated region
      $region33: #{tpu_custom_call.1} parent=5 // pred_check
        _
      $region34: #{tpu_custom_call.1} parent=5 // pred_check_branch
        %233 = sbr.rel (%p230) target = $region36
      $region35: #{tpu_custom_call.1} parent=5 // pred_region
        %s234 = ssub.s32 %s19, 1
        %s235 = sand.u32 %s32, 1
        %s236 = scalar_lea.sflag [#allocation3], %s235
        %s237 = sand.u32 %s32, 1
        %s238 = smul.addr %s237, 104
        %s239 = scalar_lea.vmem [#allocation2], %s238
        // Predicated region
        $region37: #{tpu_custom_call.1} parent=35 // pred_check
          %p240 = pneg %p45
        $region38: #{tpu_custom_call.1} parent=35 // pred_check_branch
          %242 = sbr.rel (%p240) target = $region40
        $region39: #{tpu_custom_call.1} parent=35 // pred_region
          %243 = dma.done %s236, 1664
        $region40: #{tpu_custom_call.1} parent=35 // pred_fallthru
          _
        %s244 = sand.u32 %s24, 1
        %s245 = scalar_lea.sflag [#allocation6], %s244
        %s246 = sand.u32 %s58, 1
        %s247 = smul.addr %s246, 104
        %s248 = scalar_lea.vmem [#allocation5], %s247
        // Predicated region
        $region41: #{tpu_custom_call.1} parent=35 // pred_check
          %p249 = pneg %p71
        $region42: #{tpu_custom_call.1} parent=35 // pred_check_branch
          %251 = sbr.rel (%p249) target = $region44
        $region43: #{tpu_custom_call.1} parent=35 // pred_region
          %252 = dma.done %s245, 1664
        $region44: #{tpu_custom_call.1} parent=35 // pred_fallthru
          _
        // Predicated region
        $region45: #{tpu_custom_call.1} parent=35 // pred_check
          %p253 = pneg %p92
        $region46: #{tpu_custom_call.1} parent=35 // pred_check_branch
          %255 = sbr.rel (%p253) target = $region48
        $region47: #{tpu_custom_call.1} parent=35 // pred_region
          %256 = dma.done [#allocation6], 4096
        $region48: #{tpu_custom_call.1} parent=35 // pred_fallthru
          _
        %s257 = sand.u32 %s32, 1
        %s258 = scalar_lea.sflag [#allocation3], %s257
        %s259 = sand.u32 %s32, 1
        %s260 = smul.addr %s259, 104
        %s261 = scalar_lea.vmem [#allocation2], %s260
        %p262 = pneg %p45
        %p263 = pneg %p42
        %s264 = sand.u32 %s24, 1
        %s265 = scalar_lea.sflag [#allocation6], %s264
        %s266 = sand.u32 %s58, 1
        %s267 = smul.addr %s266, 104
        %s268 = scalar_lea.vmem [#allocation5], %s267
        %p269 = pneg %p71
        %p270 = pneg %p68
        %p271 = pneg %p92
        %p272 = pneg %p89
        %p273 = pneg %p113
        %p274 = pneg %p110
        %p275 = pneg %p139
        %p276 = pneg %p136
        %s277 = sand.u32 %s126, 1
        %s278 = scalar_lea.sflag [#allocation4], %s277
        %s279 = sand.u32 %s126, 1
        %s280 = smul.addr %s279, 104
        %s281 = scalar_lea.vmem [#allocation8], %s280
        %s282 = smul.u32 26, %s24
        %s283 = ssub.s32 50, %s282
        %p284 = scmp.lt.s32.totalorder %s283, 26
        %s285 = scalar_select %p284, %s283, 26
        %s286 = smul.u32 64, %s285
        %s287 = smul.u32 26, %s24
        %s288 = ssub.s32 50, %s287
        %p289 = scmp.lt.s32.totalorder %s288, 26
        %s290 = scalar_select %p289, %s288, 26
        %s291 = smul.u32 64, %s290
        %s292 = smul.u32 26, %s24
        %s293 = ssub.s32 50, %s292
        %p294 = scmp.lt.s32.totalorder %s293, 26
        %s295 = scalar_select %p294, %s293, 26
        %s296 = smul.u32 64, %s295
        %v297 = vld [vmem:[%s239] sm:$0xf]
        %v298 = vld [vmem:[%s239 + $0x4] sm:$0xf]
        %v299 = vld [vmem:[%s239 + $0x8] sm:$0xf]
        %v300 = vld [vmem:[%s239 + $0xc] sm:$0xf]
        %v301 = vld [vmem:[%s239 + $0x10] sm:$0xf]
        %v302 = vld [vmem:[%s239 + $0x14] sm:$0xf]
        %v303 = vld [vmem:[%s239 + $0x18] sm:$0xf]
        %v304 = vld [vmem:[%s239 + $0x1c] sm:$0xf]
        %v305 = vld [vmem:[%s239 + $0x20] sm:$0xf]
        %v306 = vld [vmem:[%s239 + $0x24] sm:$0xf]
        %v307 = vld [vmem:[%s239 + $0x28] sm:$0xf]
        %v308 = vld [vmem:[%s239 + $0x2c] sm:$0xf]
        %v309 = vld [vmem:[%s239 + $0x30] sm:$0xf]
        %v310 = vld [vmem:[%s239 + $0x34] sm:$0xf]
        %v311 = vld [vmem:[%s239 + $0x38] sm:$0xf]
        %v312 = vld [vmem:[%s239 + $0x3c] sm:$0xf]
        %v313 = vld [vmem:[%s239 + $0x40] sm:$0xf]
        %v314 = vld [vmem:[%s239 + $0x44] sm:$0xf]
        %v315 = vld [vmem:[%s239 + $0x48] sm:$0xf]
        %v316 = vld [vmem:[%s239 + $0x4c] sm:$0xf]
        %v317 = vld [vmem:[%s239 + $0x50] sm:$0xf]
        %v318 = vld [vmem:[%s239 + $0x54] sm:$0xf]
        %v319 = vld [vmem:[%s239 + $0x58] sm:$0xf]
        %v320 = vld [vmem:[%s239 + $0x5c] sm:$0xf]
        %v321 = vld [vmem:[%s239 + $0x60] sm:$0xf]
        %v322 = vld [vmem:[%s239 + $0x64] sm:$0xf]
        %v323 = vunpack.c.l.bf16 %v297
        %v324 = vunpack.c.l.bf16 %v298
        %v325 = vunpack.c.l.bf16 %v299
        %v326 = vunpack.c.l.bf16 %v300
        %v327 = vunpack.c.l.bf16 %v301
        %v328 = vunpack.c.l.bf16 %v302
        %v329 = vunpack.c.l.bf16 %v303
        %v330 = vunpack.c.l.bf16 %v304
        %v331 = vunpack.c.l.bf16 %v305
        %v332 = vunpack.c.l.bf16 %v306
        %v333 = vunpack.c.l.bf16 %v307
        %v334 = vunpack.c.l.bf16 %v308
        %v335 = vunpack.c.l.bf16 %v309
        %v336 = vunpack.c.l.bf16 %v310
        %v337 = vunpack.c.l.bf16 %v311
        %v338 = vunpack.c.l.bf16 %v312
        %v339 = vunpack.c.l.bf16 %v313
        %v340 = vunpack.c.l.bf16 %v314
        %v341 = vunpack.c.l.bf16 %v315
        %v342 = vunpack.c.l.bf16 %v316
        %v343 = vunpack.c.l.bf16 %v317
        %v344 = vunpack.c.l.bf16 %v318
        %v345 = vunpack.c.l.bf16 %v319
        %v346 = vunpack.c.l.bf16 %v320
        %v347 = vunpack.c.l.bf16 %v321
        %v348 = vunpack.c.l.bf16 %v322
        %v349 = vld [vmem:[%s248] sm:$0xf]
        %v350 = vld [vmem:[%s248 + $0x4] sm:$0xf]
        %v351 = vld [vmem:[%s248 + $0x8] sm:$0xf]
        %v352 = vld [vmem:[%s248 + $0xc] sm:$0xf]
        %v353 = vld [vmem:[%s248 + $0x10] sm:$0xf]
        %v354 = vld [vmem:[%s248 + $0x14] sm:$0xf]
        %v355 = vld [vmem:[%s248 + $0x18] sm:$0xf]
        %v356 = vld [vmem:[%s248 + $0x1c] sm:$0xf]
        %v357 = vld [vmem:[%s248 + $0x20] sm:$0xf]
        %v358 = vld [vmem:[%s248 + $0x24] sm:$0xf]
        %v359 = vld [vmem:[%s248 + $0x28] sm:$0xf]
        %v360 = vld [vmem:[%s248 + $0x2c] sm:$0xf]
        %v361 = vld [vmem:[%s248 + $0x30] sm:$0xf]
        %v362 = vld [vmem:[%s248 + $0x34] sm:$0xf]
        %v363 = vld [vmem:[%s248 + $0x38] sm:$0xf]
        %v364 = vld [vmem:[%s248 + $0x3c] sm:$0xf]
        %v365 = vld [vmem:[%s248 + $0x40] sm:$0xf]
        %v366 = vld [vmem:[%s248 + $0x44] sm:$0xf]
        %v367 = vld [vmem:[%s248 + $0x48] sm:$0xf]
        %v368 = vld [vmem:[%s248 + $0x4c] sm:$0xf]
        %v369 = vld [vmem:[%s248 + $0x50] sm:$0xf]
        %v370 = vld [vmem:[%s248 + $0x54] sm:$0xf]
        %v371 = vld [vmem:[%s248 + $0x58] sm:$0xf]
        %v372 = vld [vmem:[%s248 + $0x5c] sm:$0xf]
        %v373 = vld [vmem:[%s248 + $0x60] sm:$0xf]
        %v374 = vld [vmem:[%s248 + $0x64] sm:$0xf]
        %v375 = vunpack.c.l.bf16 %v349
        %v376 = vunpack.c.l.bf16 %v350
        %v377 = vunpack.c.l.bf16 %v351
        %v378 = vunpack.c.l.bf16 %v352
        %v379 = vunpack.c.l.bf16 %v353
        %v380 = vunpack.c.l.bf16 %v354
        %v381 = vunpack.c.l.bf16 %v355
        %v382 = vunpack.c.l.bf16 %v356
        %v383 = vunpack.c.l.bf16 %v357
        %v384 = vunpack.c.l.bf16 %v358
        %v385 = vunpack.c.l.bf16 %v359
        %v386 = vunpack.c.l.bf16 %v360
        %v387 = vunpack.c.l.bf16 %v361
        %v388 = vunpack.c.l.bf16 %v362
        %v389 = vunpack.c.l.bf16 %v363
        %v390 = vunpack.c.l.bf16 %v364
        %v391 = vunpack.c.l.bf16 %v365
        %v392 = vunpack.c.l.bf16 %v366
        %v393 = vunpack.c.l.bf16 %v367
        %v394 = vunpack.c.l.bf16 %v368
        %v395 = vunpack.c.l.bf16 %v369
        %v396 = vunpack.c.l.bf16 %v370
        %v397 = vunpack.c.l.bf16 %v371
        %v398 = vunpack.c.l.bf16 %v372
        %v399 = vunpack.c.l.bf16 %v373
        %v400 = vunpack.c.l.bf16 %v374
        %401 = vadd.xlane.f32.xlu0 %v323
        %v402 = vpop.xlane.xlu0 %401
        %403 = vadd.xlane.f32.xlu0 %v324
        %v404 = vpop.xlane.xlu0 %403
        %405 = vadd.xlane.f32.xlu0 %v325
        %v406 = vpop.xlane.xlu0 %405
        %407 = vadd.xlane.f32.xlu0 %v326
        %v408 = vpop.xlane.xlu0 %407
        %409 = vadd.xlane.f32.xlu0 %v327
        %v410 = vpop.xlane.xlu0 %409
        %411 = vadd.xlane.f32.xlu0 %v328
        %v412 = vpop.xlane.xlu0 %411
        %413 = vadd.xlane.f32.xlu0 %v329
        %v414 = vpop.xlane.xlu0 %413
        %415 = vadd.xlane.f32.xlu0 %v330
        %v416 = vpop.xlane.xlu0 %415
        %417 = vadd.xlane.f32.xlu0 %v331
        %v418 = vpop.xlane.xlu0 %417
        %419 = vadd.xlane.f32.xlu0 %v332
        %v420 = vpop.xlane.xlu0 %419
        %421 = vadd.xlane.f32.xlu0 %v333
        %v422 = vpop.xlane.xlu0 %421
        %423 = vadd.xlane.f32.xlu0 %v334
        %v424 = vpop.xlane.xlu0 %423
        %425 = vadd.xlane.f32.xlu0 %v335
        %v426 = vpop.xlane.xlu0 %425
        %427 = vadd.xlane.f32.xlu0 %v336
        %v428 = vpop.xlane.xlu0 %427
        %429 = vadd.xlane.f32.xlu0 %v337
        %v430 = vpop.xlane.xlu0 %429
        %431 = vadd.xlane.f32.xlu0 %v338
        %v432 = vpop.xlane.xlu0 %431
        %433 = vadd.xlane.f32.xlu0 %v339
        %v434 = vpop.xlane.xlu0 %433
        %435 = vadd.xlane.f32.xlu0 %v340
        %v436 = vpop.xlane.xlu0 %435
        %437 = vadd.xlane.f32.xlu0 %v341
        %v438 = vpop.xlane.xlu0 %437
        %439 = vadd.xlane.f32.xlu0 %v342
        %v440 = vpop.xlane.xlu0 %439
        %441 = vadd.xlane.f32.xlu0 %v343
        %v442 = vpop.xlane.xlu0 %441
        %443 = vadd.xlane.f32.xlu0 %v344
        %v444 = vpop.xlane.xlu0 %443
        %445 = vadd.xlane.f32.xlu0 %v345
        %v446 = vpop.xlane.xlu0 %445
        %447 = vadd.xlane.f32.xlu0 %v346
        %v448 = vpop.xlane.xlu0 %447
        %449 = vadd.xlane.f32.xlu0 %v347
        %v450 = vpop.xlane.xlu0 %449
        %451 = vadd.xlane.f32.xlu0 %v348
        %v452 = vpop.xlane.xlu0 %451
        %v453 = vrcp.pop 128.0
        %v454 = vmul.f32 %v402, %v453
        %v455 = vmul.f32 %v404, %v453
        %v456 = vmul.f32 %v406, %v453
        %v457 = vmul.f32 %v408, %v453
        %v458 = vmul.f32 %v410, %v453
        %v459 = vmul.f32 %v412, %v453
        %v460 = vmul.f32 %v414, %v453
        %v461 = vmul.f32 %v416, %v453
        %v462 = vmul.f32 %v418, %v453
        %v463 = vmul.f32 %v420, %v453
        %v464 = vmul.f32 %v422, %v453
        %v465 = vmul.f32 %v424, %v453
        %v466 = vmul.f32 %v426, %v453
        %v467 = vmul.f32 %v428, %v453
        %v468 = vmul.f32 %v430, %v453
        %v469 = vmul.f32 %v432, %v453
        %v470 = vmul.f32 %v434, %v453
        %v471 = vmul.f32 %v436, %v453
        %v472 = vmul.f32 %v438, %v453
        %v473 = vmul.f32 %v440, %v453
        %v474 = vmul.f32 %v442, %v453
        %v475 = vmul.f32 %v444, %v453
        %v476 = vmul.f32 %v446, %v453
        %v477 = vmul.f32 %v448, %v453
        %v478 = vmul.f32 %v450, %v453
        %v479 = vmul.f32 %v452, %v453
        %v480 = vsub.f32 %v323, %v454
        %v481 = vsub.f32 %v324, %v455
        %v482 = vsub.f32 %v325, %v456
        %v483 = vsub.f32 %v326, %v457
        %v484 = vsub.f32 %v327, %v458
        %v485 = vsub.f32 %v328, %v459
        %v486 = vsub.f32 %v329, %v460
        %v487 = vsub.f32 %v330, %v461
        %v488 = vsub.f32 %v331, %v462
        %v489 = vsub.f32 %v332, %v463
        %v490 = vsub.f32 %v333, %v464
        %v491 = vsub.f32 %v334, %v465
        %v492 = vsub.f32 %v335, %v466
        %v493 = vsub.f32 %v336, %v467
        %v494 = vsub.f32 %v337, %v468
        %v495 = vsub.f32 %v338, %v469
        %v496 = vsub.f32 %v339, %v470
        %v497 = vsub.f32 %v340, %v471
        %v498 = vsub.f32 %v341, %v472
        %v499 = vsub.f32 %v342, %v473
        %v500 = vsub.f32 %v343, %v474
        %v501 = vsub.f32 %v344, %v475
        %v502 = vsub.f32 %v345, %v476
        %v503 = vsub.f32 %v346, %v477
        %v504 = vsub.f32 %v347, %v478
        %v505 = vsub.f32 %v348, %v479
        %v506 = vmul.f32 %v480, %v480
        %v507 = vmul.f32 %v481, %v481
        %v508 = vmul.f32 %v482, %v482
        %v509 = vmul.f32 %v483, %v483
        %v510 = vmul.f32 %v484, %v484
        %v511 = vmul.f32 %v485, %v485
        %v512 = vmul.f32 %v486, %v486
        %v513 = vmul.f32 %v487, %v487
        %v514 = vmul.f32 %v488, %v488
        %v515 = vmul.f32 %v489, %v489
        %v516 = vmul.f32 %v490, %v490
        %v517 = vmul.f32 %v491, %v491
        %v518 = vmul.f32 %v492, %v492
        %v519 = vmul.f32 %v493, %v493
        %v520 = vmul.f32 %v494, %v494
        %v521 = vmul.f32 %v495, %v495
        %v522 = vmul.f32 %v496, %v496
        %v523 = vmul.f32 %v497, %v497
        %v524 = vmul.f32 %v498, %v498
        %v525 = vmul.f32 %v499, %v499
        %v526 = vmul.f32 %v500, %v500
        %v527 = vmul.f32 %v501, %v501
        %v528 = vmul.f32 %v502, %v502
        %v529 = vmul.f32 %v503, %v503
        %v530 = vmul.f32 %v504, %v504
        %v531 = vmul.f32 %v505, %v505
        %532 = vadd.xlane.f32.xlu0 %v506
        %v533 = vpop.xlane.xlu0 %532
        %534 = vadd.xlane.f32.xlu0 %v507
        %v535 = vpop.xlane.xlu0 %534
        %536 = vadd.xlane.f32.xlu0 %v508
        %v537 = vpop.xlane.xlu0 %536
        %538 = vadd.xlane.f32.xlu0 %v509
        %v539 = vpop.xlane.xlu0 %538
        %540 = vadd.xlane.f32.xlu0 %v510
        %v541 = vpop.xlane.xlu0 %540
        %542 = vadd.xlane.f32.xlu0 %v511
        %v543 = vpop.xlane.xlu0 %542
        %544 = vadd.xlane.f32.xlu0 %v512
        %v545 = vpop.xlane.xlu0 %544
        %546 = vadd.xlane.f32.xlu0 %v513
        %v547 = vpop.xlane.xlu0 %546
        %548 = vadd.xlane.f32.xlu0 %v514
        %v549 = vpop.xlane.xlu0 %548
        %550 = vadd.xlane.f32.xlu0 %v515
        %v551 = vpop.xlane.xlu0 %550
        %552 = vadd.xlane.f32.xlu0 %v516
        %v553 = vpop.xlane.xlu0 %552
        %554 = vadd.xlane.f32.xlu0 %v517
        %v555 = vpop.xlane.xlu0 %554
        %556 = vadd.xlane.f32.xlu0 %v518
        %v557 = vpop.xlane.xlu0 %556
        %558 = vadd.xlane.f32.xlu0 %v519
        %v559 = vpop.xlane.xlu0 %558
        %560 = vadd.xlane.f32.xlu0 %v520
        %v561 = vpop.xlane.xlu0 %560
        %562 = vadd.xlane.f32.xlu0 %v521
        %v563 = vpop.xlane.xlu0 %562
        %564 = vadd.xlane.f32.xlu0 %v522
        %v565 = vpop.xlane.xlu0 %564
        %566 = vadd.xlane.f32.xlu0 %v523
        %v567 = vpop.xlane.xlu0 %566
        %568 = vadd.xlane.f32.xlu0 %v524
        %v569 = vpop.xlane.xlu0 %568
        %570 = vadd.xlane.f32.xlu0 %v525
        %v571 = vpop.xlane.xlu0 %570
        %572 = vadd.xlane.f32.xlu0 %v526
        %v573 = vpop.xlane.xlu0 %572
        %574 = vadd.xlane.f32.xlu0 %v527
        %v575 = vpop.xlane.xlu0 %574
        %576 = vadd.xlane.f32.xlu0 %v528
        %v577 = vpop.xlane.xlu0 %576
        %578 = vadd.xlane.f32.xlu0 %v529
        %v579 = vpop.xlane.xlu0 %578
        %580 = vadd.xlane.f32.xlu0 %v530
        %v581 = vpop.xlane.xlu0 %580
        %582 = vadd.xlane.f32.xlu0 %v531
        %v583 = vpop.xlane.xlu0 %582
        %v584 = vmul.f32 %v533, %v453
        %v585 = vmul.f32 %v535, %v453
        %v586 = vmul.f32 %v537, %v453
        %v587 = vmul.f32 %v539, %v453
        %v588 = vmul.f32 %v541, %v453
        %v589 = vmul.f32 %v543, %v453
        %v590 = vmul.f32 %v545, %v453
        %v591 = vmul.f32 %v547, %v453
        %v592 = vmul.f32 %v549, %v453
        %v593 = vmul.f32 %v551, %v453
        %v594 = vmul.f32 %v553, %v453
        %v595 = vmul.f32 %v555, %v453
        %v596 = vmul.f32 %v557, %v453
        %v597 = vmul.f32 %v559, %v453
        %v598 = vmul.f32 %v561, %v453
        %v599 = vmul.f32 %v563, %v453
        %v600 = vmul.f32 %v565, %v453
        %v601 = vmul.f32 %v567, %v453
        %v602 = vmul.f32 %v569, %v453
        %v603 = vmul.f32 %v571, %v453
        %v604 = vmul.f32 %v573, %v453
        %v605 = vmul.f32 %v575, %v453
        %v606 = vmul.f32 %v577, %v453
        %v607 = vmul.f32 %v579, %v453
        %v608 = vmul.f32 %v581, %v453
        %v609 = vmul.f32 %v583, %v453
        %v610 = vadd.f32 %v584, 1e-05
        %v611 = vadd.f32 %v585, 1e-05
        %v612 = vadd.f32 %v586, 1e-05
        %v613 = vadd.f32 %v587, 1e-05
        %v614 = vadd.f32 %v588, 1e-05
        %v615 = vadd.f32 %v589, 1e-05
        %v616 = vadd.f32 %v590, 1e-05
        %v617 = vadd.f32 %v591, 1e-05
        %v618 = vadd.f32 %v592, 1e-05
        %v619 = vadd.f32 %v593, 1e-05
        %v620 = vadd.f32 %v594, 1e-05
        %v621 = vadd.f32 %v595, 1e-05
        %v622 = vadd.f32 %v596, 1e-05
        %v623 = vadd.f32 %v597, 1e-05
        %v624 = vadd.f32 %v598, 1e-05
        %v625 = vadd.f32 %v599, 1e-05
        %v626 = vadd.f32 %v600, 1e-05
        %v627 = vadd.f32 %v601, 1e-05
        %v628 = vadd.f32 %v602, 1e-05
        %v629 = vadd.f32 %v603, 1e-05
        %v630 = vadd.f32 %v604, 1e-05
        %v631 = vadd.f32 %v605, 1e-05
        %v632 = vadd.f32 %v606, 1e-05
        %v633 = vadd.f32 %v607, 1e-05
        %v634 = vadd.f32 %v608, 1e-05
        %v635 = vadd.f32 %v609, 1e-05
        %v636 = vrsqrt.pop %v610
        %v637 = vrsqrt.pop %v611
        %v638 = vrsqrt.pop %v612
        %v639 = vrsqrt.pop %v613
        %v640 = vrsqrt.pop %v614
        %v641 = vrsqrt.pop %v615
        %v642 = vrsqrt.pop %v616
        %v643 = vrsqrt.pop %v617
        %v644 = vrsqrt.pop %v618
        %v645 = vrsqrt.pop %v619
        %v646 = vrsqrt.pop %v620
        %v647 = vrsqrt.pop %v621
        %v648 = vrsqrt.pop %v622
        %v649 = vrsqrt.pop %v623
        %v650 = vrsqrt.pop %v624
        %v651 = vrsqrt.pop %v625
        %v652 = vrsqrt.pop %v626
        %v653 = vrsqrt.pop %v627
        %v654 = vrsqrt.pop %v628
        %v655 = vrsqrt.pop %v629
        %v656 = vrsqrt.pop %v630
        %v657 = vrsqrt.pop %v631
        %v658 = vrsqrt.pop %v632
        %v659 = vrsqrt.pop %v633
        %v660 = vrsqrt.pop %v634
        %v661 = vrsqrt.pop %v635
        %v662 = vmul.f32 %v480, %v636
        %v663 = vmul.f32 %v481, %v637
        %v664 = vmul.f32 %v482, %v638
        %v665 = vmul.f32 %v483, %v639
        %v666 = vmul.f32 %v484, %v640
        %v667 = vmul.f32 %v485, %v641
        %v668 = vmul.f32 %v486, %v642
        %v669 = vmul.f32 %v487, %v643
        %v670 = vmul.f32 %v488, %v644
        %v671 = vmul.f32 %v489, %v645
        %v672 = vmul.f32 %v490, %v646
        %v673 = vmul.f32 %v491, %v647
        %v674 = vmul.f32 %v492, %v648
        %v675 = vmul.f32 %v493, %v649
        %v676 = vmul.f32 %v494, %v650
        %v677 = vmul.f32 %v495, %v651
        %v678 = vmul.f32 %v496, %v652
        %v679 = vmul.f32 %v497, %v653
        %v680 = vmul.f32 %v498, %v654
        %v681 = vmul.f32 %v499, %v655
        %v682 = vmul.f32 %v500, %v656
        %v683 = vmul.f32 %v501, %v657
        %v684 = vmul.f32 %v502, %v658
        %v685 = vmul.f32 %v503, %v659
        %v686 = vmul.f32 %v504, %v660
        %v687 = vmul.f32 %v505, %v661
        %688 = vadd.xlane.f32.xlu0 %v375
        %v689 = vpop.xlane.xlu0 %688
        %690 = vadd.xlane.f32.xlu0 %v376
        %v691 = vpop.xlane.xlu0 %690
        %692 = vadd.xlane.f32.xlu0 %v377
        %v693 = vpop.xlane.xlu0 %692
        %694 = vadd.xlane.f32.xlu0 %v378
        %v695 = vpop.xlane.xlu0 %694
        %696 = vadd.xlane.f32.xlu0 %v379
        %v697 = vpop.xlane.xlu0 %696
        %698 = vadd.xlane.f32.xlu0 %v380
        %v699 = vpop.xlane.xlu0 %698
        %700 = vadd.xlane.f32.xlu0 %v381
        %v701 = vpop.xlane.xlu0 %700
        %702 = vadd.xlane.f32.xlu0 %v382
        %v703 = vpop.xlane.xlu0 %702
        %704 = vadd.xlane.f32.xlu0 %v383
        %v705 = vpop.xlane.xlu0 %704
        %706 = vadd.xlane.f32.xlu0 %v384
        %v707 = vpop.xlane.xlu0 %706
        %708 = vadd.xlane.f32.xlu0 %v385
        %v709 = vpop.xlane.xlu0 %708
        %710 = vadd.xlane.f32.xlu0 %v386
        %v711 = vpop.xlane.xlu0 %710
        %712 = vadd.xlane.f32.xlu0 %v387
        %v713 = vpop.xlane.xlu0 %712
        %714 = vadd.xlane.f32.xlu0 %v388
        %v715 = vpop.xlane.xlu0 %714
        %716 = vadd.xlane.f32.xlu0 %v389
        %v717 = vpop.xlane.xlu0 %716
        %718 = vadd.xlane.f32.xlu0 %v390
        %v719 = vpop.xlane.xlu0 %718
        %720 = vadd.xlane.f32.xlu0 %v391
        %v721 = vpop.xlane.xlu0 %720
        %722 = vadd.xlane.f32.xlu0 %v392
        %v723 = vpop.xlane.xlu0 %722
        %724 = vadd.xlane.f32.xlu0 %v393
        %v725 = vpop.xlane.xlu0 %724
        %726 = vadd.xlane.f32.xlu0 %v394
        %v727 = vpop.xlane.xlu0 %726
        %728 = vadd.xlane.f32.xlu0 %v395
        %v729 = vpop.xlane.xlu0 %728
        %730 = vadd.xlane.f32.xlu0 %v396
        %v731 = vpop.xlane.xlu0 %730
        %732 = vadd.xlane.f32.xlu0 %v397
        %v733 = vpop.xlane.xlu0 %732
        %734 = vadd.xlane.f32.xlu0 %v398
        %v735 = vpop.xlane.xlu0 %734
        %736 = vadd.xlane.f32.xlu0 %v399
        %v737 = vpop.xlane.xlu0 %736
        %738 = vadd.xlane.f32.xlu0 %v400
        %v739 = vpop.xlane.xlu0 %738
        %v740 = vmul.f32 %v689, %v453
        %v741 = vmul.f32 %v691, %v453
        %v742 = vmul.f32 %v693, %v453
        %v743 = vmul.f32 %v695, %v453
        %v744 = vmul.f32 %v697, %v453
        %v745 = vmul.f32 %v699, %v453
        %v746 = vmul.f32 %v701, %v453
        %v747 = vmul.f32 %v703, %v453
        %v748 = vmul.f32 %v705, %v453
        %v749 = vmul.f32 %v707, %v453
        %v750 = vmul.f32 %v709, %v453
        %v751 = vmul.f32 %v711, %v453
        %v752 = vmul.f32 %v713, %v453
        %v753 = vmul.f32 %v715, %v453
        %v754 = vmul.f32 %v717, %v453
        %v755 = vmul.f32 %v719, %v453
        %v756 = vmul.f32 %v721, %v453
        %v757 = vmul.f32 %v723, %v453
        %v758 = vmul.f32 %v725, %v453
        %v759 = vmul.f32 %v727, %v453
        %v760 = vmul.f32 %v729, %v453
        %v761 = vmul.f32 %v731, %v453
        %v762 = vmul.f32 %v733, %v453
        %v763 = vmul.f32 %v735, %v453
        %v764 = vmul.f32 %v737, %v453
        %v765 = vmul.f32 %v739, %v453
        %v766 = vsub.f32 %v375, %v740
        %v767 = vsub.f32 %v376, %v741
        %v768 = vsub.f32 %v377, %v742
        %v769 = vsub.f32 %v378, %v743
        %v770 = vsub.f32 %v379, %v744
        %v771 = vsub.f32 %v380, %v745
        %v772 = vsub.f32 %v381, %v746
        %v773 = vsub.f32 %v382, %v747
        %v774 = vsub.f32 %v383, %v748
        %v775 = vsub.f32 %v384, %v749
        %v776 = vsub.f32 %v385, %v750
        %v777 = vsub.f32 %v386, %v751
        %v778 = vsub.f32 %v387, %v752
        %v779 = vsub.f32 %v388, %v753
        %v780 = vsub.f32 %v389, %v754
        %v781 = vsub.f32 %v390, %v755
        %v782 = vsub.f32 %v391, %v756
        %v783 = vsub.f32 %v392, %v757
        %v784 = vsub.f32 %v393, %v758
        %v785 = vsub.f32 %v394, %v759
        %v786 = vsub.f32 %v395, %v760
        %v787 = vsub.f32 %v396, %v761
        %v788 = vsub.f32 %v397, %v762
        %v789 = vsub.f32 %v398, %v763
        %v790 = vsub.f32 %v399, %v764
        %v791 = vsub.f32 %v400, %v765
        %v792 = vmul.f32 %v766, %v766
        %v793 = vmul.f32 %v767, %v767
        %v794 = vmul.f32 %v768, %v768
        %v795 = vmul.f32 %v769, %v769
        %v796 = vmul.f32 %v770, %v770
        %v797 = vmul.f32 %v771, %v771
        %v798 = vmul.f32 %v772, %v772
        %v799 = vmul.f32 %v773, %v773
        %v800 = vmul.f32 %v774, %v774
        %v801 = vmul.f32 %v775, %v775
        %v802 = vmul.f32 %v776, %v776
        %v803 = vmul.f32 %v777, %v777
        %v804 = vmul.f32 %v778, %v778
        %v805 = vmul.f32 %v779, %v779
        %v806 = vmul.f32 %v780, %v780
        %v807 = vmul.f32 %v781, %v781
        %v808 = vmul.f32 %v782, %v782
        %v809 = vmul.f32 %v783, %v783
        %v810 = vmul.f32 %v784, %v784
        %v811 = vmul.f32 %v785, %v785
        %v812 = vmul.f32 %v786, %v786
        %v813 = vmul.f32 %v787, %v787
        %v814 = vmul.f32 %v788, %v788
        %v815 = vmul.f32 %v789, %v789
        %v816 = vmul.f32 %v790, %v790
        %v817 = vmul.f32 %v791, %v791
        %818 = vadd.xlane.f32.xlu0 %v792
        %v819 = vpop.xlane.xlu0 %818
        %820 = vadd.xlane.f32.xlu0 %v793
        %v821 = vpop.xlane.xlu0 %820
        %822 = vadd.xlane.f32.xlu0 %v794
        %v823 = vpop.xlane.xlu0 %822
        %824 = vadd.xlane.f32.xlu0 %v795
        %v825 = vpop.xlane.xlu0 %824
        %826 = vadd.xlane.f32.xlu0 %v796
        %v827 = vpop.xlane.xlu0 %826
        %828 = vadd.xlane.f32.xlu0 %v797
        %v829 = vpop.xlane.xlu0 %828
        %830 = vadd.xlane.f32.xlu0 %v798
        %v831 = vpop.xlane.xlu0 %830
        %832 = vadd.xlane.f32.xlu0 %v799
        %v833 = vpop.xlane.xlu0 %832
        %834 = vadd.xlane.f32.xlu0 %v800
        %v835 = vpop.xlane.xlu0 %834
        %836 = vadd.xlane.f32.xlu0 %v801
        %v837 = vpop.xlane.xlu0 %836
        %838 = vadd.xlane.f32.xlu0 %v802
        %v839 = vpop.xlane.xlu0 %838
        %840 = vadd.xlane.f32.xlu0 %v803
        %v841 = vpop.xlane.xlu0 %840
        %842 = vadd.xlane.f32.xlu0 %v804
        %v843 = vpop.xlane.xlu0 %842
        %844 = vadd.xlane.f32.xlu0 %v805
        %v845 = vpop.xlane.xlu0 %844
        %846 = vadd.xlane.f32.xlu0 %v806
        %v847 = vpop.xlane.xlu0 %846
        %848 = vadd.xlane.f32.xlu0 %v807
        %v849 = vpop.xlane.xlu0 %848
        %850 = vadd.xlane.f32.xlu0 %v808
        %v851 = vpop.xlane.xlu0 %850
        %852 = vadd.xlane.f32.xlu0 %v809
        %v853 = vpop.xlane.xlu0 %852
        %854 = vadd.xlane.f32.xlu0 %v810
        %v855 = vpop.xlane.xlu0 %854
        %856 = vadd.xlane.f32.xlu0 %v811
        %v857 = vpop.xlane.xlu0 %856
        %858 = vadd.xlane.f32.xlu0 %v812
        %v859 = vpop.xlane.xlu0 %858
        %860 = vadd.xlane.f32.xlu0 %v813
        %v861 = vpop.xlane.xlu0 %860
        %862 = vadd.xlane.f32.xlu0 %v814
        %v863 = vpop.xlane.xlu0 %862
        %864 = vadd.xlane.f32.xlu0 %v815
        %v865 = vpop.xlane.xlu0 %864
        %866 = vadd.xlane.f32.xlu0 %v816
        %v867 = vpop.xlane.xlu0 %866
        %868 = vadd.xlane.f32.xlu0 %v817
        %v869 = vpop.xlane.xlu0 %868
        %v870 = vmul.f32 %v819, %v453
        %v871 = vmul.f32 %v821, %v453
        %v872 = vmul.f32 %v823, %v453
        %v873 = vmul.f32 %v825, %v453
        %v874 = vmul.f32 %v827, %v453
        %v875 = vmul.f32 %v829, %v453
        %v876 = vmul.f32 %v831, %v453
        %v877 = vmul.f32 %v833, %v453
        %v878 = vmul.f32 %v835, %v453
        %v879 = vmul.f32 %v837, %v453
        %v880 = vmul.f32 %v839, %v453
        %v881 = vmul.f32 %v841, %v453
        %v882 = vmul.f32 %v843, %v453
        %v883 = vmul.f32 %v845, %v453
        %v884 = vmul.f32 %v847, %v453
        %v885 = vmul.f32 %v849, %v453
        %v886 = vmul.f32 %v851, %v453
        %v887 = vmul.f32 %v853, %v453
        %v888 = vmul.f32 %v855, %v453
        %v889 = vmul.f32 %v857, %v453
        %v890 = vmul.f32 %v859, %v453
        %v891 = vmul.f32 %v861, %v453
        %v892 = vmul.f32 %v863, %v453
        %v893 = vmul.f32 %v865, %v453
        %v894 = vmul.f32 %v867, %v453
        %v895 = vmul.f32 %v869, %v453
        %v896 = vadd.f32 %v870, 1e-05
        %v897 = vadd.f32 %v871, 1e-05
        %v898 = vadd.f32 %v872, 1e-05
        %v899 = vadd.f32 %v873, 1e-05
        %v900 = vadd.f32 %v874, 1e-05
        %v901 = vadd.f32 %v875, 1e-05
        %v902 = vadd.f32 %v876, 1e-05
        %v903 = vadd.f32 %v877, 1e-05
        %v904 = vadd.f32 %v878, 1e-05
        %v905 = vadd.f32 %v879, 1e-05
        %v906 = vadd.f32 %v880, 1e-05
        %v907 = vadd.f32 %v881, 1e-05
        %v908 = vadd.f32 %v882, 1e-05
        %v909 = vadd.f32 %v883, 1e-05
        %v910 = vadd.f32 %v884, 1e-05
        %v911 = vadd.f32 %v885, 1e-05
        %v912 = vadd.f32 %v886, 1e-05
        %v913 = vadd.f32 %v887, 1e-05
        %v914 = vadd.f32 %v888, 1e-05
        %v915 = vadd.f32 %v889, 1e-05
        %v916 = vadd.f32 %v890, 1e-05
        %v917 = vadd.f32 %v891, 1e-05
        %v918 = vadd.f32 %v892, 1e-05
        %v919 = vadd.f32 %v893, 1e-05
        %v920 = vadd.f32 %v894, 1e-05
        %v921 = vadd.f32 %v895, 1e-05
        %v922 = vrsqrt.pop %v896
        %v923 = vrsqrt.pop %v897
        %v924 = vrsqrt.pop %v898
        %v925 = vrsqrt.pop %v899
        %v926 = vrsqrt.pop %v900
        %v927 = vrsqrt.pop %v901
        %v928 = vrsqrt.pop %v902
        %v929 = vrsqrt.pop %v903
        %v930 = vrsqrt.pop %v904
        %v931 = vrsqrt.pop %v905
        %v932 = vrsqrt.pop %v906
        %v933 = vrsqrt.pop %v907
        %v934 = vrsqrt.pop %v908
        %v935 = vrsqrt.pop %v909
        %v936 = vrsqrt.pop %v910
        %v937 = vrsqrt.pop %v911
        %v938 = vrsqrt.pop %v912
        %v939 = vrsqrt.pop %v913
        %v940 = vrsqrt.pop %v914
        %v941 = vrsqrt.pop %v915
        %v942 = vrsqrt.pop %v916
        %v943 = vrsqrt.pop %v917
        %v944 = vrsqrt.pop %v918
        %v945 = vrsqrt.pop %v919
        %v946 = vrsqrt.pop %v920
        %v947 = vrsqrt.pop %v921
        %v948 = vmul.f32 %v766, %v922
        %v949 = vmul.f32 %v767, %v923
        %v950 = vmul.f32 %v768, %v924
        %v951 = vmul.f32 %v769, %v925
        %v952 = vmul.f32 %v770, %v926
        %v953 = vmul.f32 %v771, %v927
        %v954 = vmul.f32 %v772, %v928
        %v955 = vmul.f32 %v773, %v929
        %v956 = vmul.f32 %v774, %v930
        %v957 = vmul.f32 %v775, %v931
        %v958 = vmul.f32 %v776, %v932
        %v959 = vmul.f32 %v777, %v933
        %v960 = vmul.f32 %v778, %v934
        %v961 = vmul.f32 %v779, %v935
        %v962 = vmul.f32 %v780, %v936
        %v963 = vmul.f32 %v781, %v937
        %v964 = vmul.f32 %v782, %v938
        %v965 = vmul.f32 %v783, %v939
        %v966 = vmul.f32 %v784, %v940
        %v967 = vmul.f32 %v785, %v941
        %v968 = vmul.f32 %v786, %v942
        %v969 = vmul.f32 %v787, %v943
        %v970 = vmul.f32 %v788, %v944
        %v971 = vmul.f32 %v789, %v945
        %v972 = vmul.f32 %v790, %v946
        %v973 = vmul.f32 %v791, %v947
        %v974 = vld [vmem:[#allocation7] sm:$0xff]
        %v975 = vld [vmem:[#allocation7 + $0x8] sm:$0xff]
        %v976 = vld [vmem:[#allocation7 + $0x10] sm:$0xff]
        %v977 = vld [vmem:[#allocation7 + $0x18] sm:$0xff]
        %v978 = vld [vmem:[#allocation7 + $0x20] sm:$0xff]
        %v979 = vld [vmem:[#allocation7 + $0x28] sm:$0xff]
        %v980 = vld [vmem:[#allocation7 + $0x30] sm:$0xff]
        %v981 = vld [vmem:[#allocation7 + $0x38] sm:$0xff]
        %v982 = vld [vmem:[#allocation7 + $0x40] sm:$0xff]
        %v983 = vld [vmem:[#allocation7 + $0x48] sm:$0xff]
        %v984 = vld [vmem:[#allocation7 + $0x50] sm:$0xff]
        %v985 = vld [vmem:[#allocation7 + $0x58] sm:$0xff]
        %v986 = vld [vmem:[#allocation7 + $0x60] sm:$0xff]
        %v987 = vld [vmem:[#allocation7 + $0x68] sm:$0xff]
        %v988 = vld [vmem:[#allocation7 + $0x70] sm:$0xff]
        %v989 = vld [vmem:[#allocation7 + $0x78] sm:$0xff]
        %v990 = vld [vmem:[#allocation7 + $0x80] sm:$0xff]
        %v991 = vld [vmem:[#allocation7 + $0x88] sm:$0xff]
        %v992 = vld [vmem:[#allocation7 + $0x90] sm:$0xff]
        %v993 = vld [vmem:[#allocation7 + $0x98] sm:$0xff]
        %v994 = vld [vmem:[#allocation7 + $0xa0] sm:$0xff]
        %v995 = vld [vmem:[#allocation7 + $0xa8] sm:$0xff]
        %v996 = vld [vmem:[#allocation7 + $0xb0] sm:$0xff]
        %v997 = vld [vmem:[#allocation7 + $0xb8] sm:$0xff]
        %v998 = vld [vmem:[#allocation7 + $0xc0] sm:$0xff]
        %v999 = vld [vmem:[#allocation7 + $0xc8] sm:$0xff]
        %v1000 = vld [vmem:[#allocation7 + $0xd0] sm:$0xff]
        %v1001 = vld [vmem:[#allocation7 + $0xd8] sm:$0xff]
        %v1002 = vld [vmem:[#allocation7 + $0xe0] sm:$0xff]
        %v1003 = vld [vmem:[#allocation7 + $0xe8] sm:$0xff]
        %v1004 = vld [vmem:[#allocation7 + $0xf0] sm:$0xff]
        %v1005 = vld [vmem:[#allocation7 + $0xf8] sm:$0xff]
        %1006 = vmatprep.subr.mxu0 %v975
        %1007 = vmatpush1.msra.mxu0 %v974
        %1008 = vmatprep.subr.mxu0 %v977
        %1009 = vmatpush1.msra.mxu0 %v976
        %1010 = vmatprep.subr.mxu0 %v979
        %1011 = vmatpush1.msra.mxu0 %v978
        %1012 = vmatprep.subr.mxu0 %v981
        %1013 = vmatpush1.msra.mxu0 %v980
        %1014 = vmatprep.subr.mxu0 %v983
        %1015 = vmatpush1.msra.mxu0 %v982
        %1016 = vmatprep.subr.mxu0 %v985
        %1017 = vmatpush1.msra.mxu0 %v984
        %1018 = vmatprep.subr.mxu0 %v987
        %1019 = vmatpush1.msra.mxu0 %v986
        %1020 = vmatprep.subr.mxu0 %v989
        %1021 = vmatpush1.msra.mxu0 %v988
        %1022 = vmatprep.subr.mxu0 %v991
        %1023 = vmatpush1.msra.mxu0 %v990
        %1024 = vmatprep.subr.mxu0 %v993
        %1025 = vmatpush1.msra.mxu0 %v992
        %1026 = vmatprep.subr.mxu0 %v995
        %1027 = vmatpush1.msra.mxu0 %v994
        %1028 = vmatprep.subr.mxu0 %v997
        %1029 = vmatpush1.msra.mxu0 %v996
        %1030 = vmatprep.subr.mxu0 %v999
        %1031 = vmatpush1.msra.mxu0 %v998
        %1032 = vmatprep.subr.mxu0 %v1001
        %1033 = vmatpush1.msra.mxu0 %v1000
        %1034 = vmatprep.subr.mxu0 %v1003
        %1035 = vmatpush1.msra.mxu0 %v1002
        %1036 = vmatprep.subr.mxu0 %v1005
        %1037 = vmatpush1.msra.mxu0 %v1004
        %1038 = vmatprep.subr.mxu0 0.0
        %1039 = vmatpush1.msra.mxu0 0.0
        %1040 = vmatprep.subr.mxu0 0.0
        %1041 = vmatpush1.msra.mxu0 0.0
        %1042 = vmatprep.subr.mxu0 0.0
        %1043 = vmatpush1.msra.mxu0 0.0
        %1044 = vmatprep.subr.mxu0 0.0
        %1045 = vmatpush1.msra.mxu0 0.0
        %1046 = vmatprep.subr.mxu0 0.0
        %1047 = vmatpush1.msra.mxu0 0.0
        %1048 = vmatprep.subr.mxu0 0.0
        %1049 = vmatpush1.msra.mxu0 0.0
        %1050 = vmatprep.subr.mxu0 0.0
        %1051 = vmatpush1.msra.mxu0 0.0
        %1052 = vmatprep.subr.mxu0 0.0
        %1053 = vmatpush1.msra.mxu0 0.0
        %1054 = vmatprep.subr.mxu0 0.0
        %1055 = vmatpush1.msra.mxu0 0.0
        %1056 = vmatprep.subr.mxu0 0.0
        %1057 = vmatpush1.msra.mxu0 0.0
        %1058 = vmatprep.subr.mxu0 0.0
        %1059 = vmatpush1.msra.mxu0 0.0
        %1060 = vmatprep.subr.mxu0 0.0
        %1061 = vmatpush1.msra.mxu0 0.0
        %1062 = vmatprep.subr.mxu0 0.0
        %1063 = vmatpush1.msra.mxu0 0.0
        %1064 = vmatprep.subr.mxu0 0.0
        %1065 = vmatpush1.msra.mxu0 0.0
        %1066 = vmatprep.subr.mxu0 0.0
        %1067 = vmatpush1.msra.mxu0 0.0
        %1068 = vmatprep.subr.mxu0 0.0
        %1069 = vmatpush1.msra.mxu0 0.0
        %1070 = vmatprep.mubr.f32.mxu0 0.0
        %1071 = vmatmul.mubr.f32.gmra.mrb[0].mxu0 %v948
        %v1072 = vpop.f32.mrb[0].mxu0
        %v1073 = vadd.f32 0.0, %v1072
        %v1074 = vpop.f32.mrb[0].mxu0
        %v1075 = vadd.f32 0.0, %v1074
        %1076 = vmatprep.mubr.f32.mxu0 0.0
        %1077 = vmatmul.mubr.f32.gmra.mrb[0].mxu0 %v949
        %v1078 = vpop.f32.mrb[0].mxu0
        %v1079 = vadd.f32 0.0, %v1078
        %v1080 = vpop.f32.mrb[0].mxu0
        %v1081 = vadd.f32 0.0, %v1080
        %1082 = vmatprep.mubr.f32.mxu0 0.0
        %1083 = vmatmul.mubr.f32.gmra.mrb[0].mxu0 %v950
        %v1084 = vpop.f32.mrb[0].mxu0
        %v1085 = vadd.f32 0.0, %v1084
        %v1086 = vpop.f32.mrb[0].mxu0
        %v1087 = vadd.f32 0.0, %v1086
        %1088 = vmatprep.mubr.f32.mxu0 0.0
        %1089 = vmatmul.mubr.f32.gmra.mrb[0].mxu0 %v951
        %v1090 = vpop.f32.mrb[0].mxu0
        %v1091 = vadd.f32 0.0, %v1090
        %v1092 = vpop.f32.mrb[0].mxu0
        %v1093 = vadd.f32 0.0, %v1092
        %1094 = vmatprep.mubr.f32.mxu0 0.0
        %1095 = vmatmul.mubr.f32.gmra.mrb[0].mxu0 %v952
        %v1096 = vpop.f32.mrb[0].mxu0
        %v1097 = vadd.f32 0.0, %v1096
        %v1098 = vpop.f32.mrb[0].mxu0
        %v1099 = vadd.f32 0.0, %v1098
        %1100 = vmatprep.mubr.f32.mxu0 0.0
        %1101 = vmatmul.mubr.f32.gmra.mrb[0].mxu0 %v953
        %v1102 = vpop.f32.mrb[0].mxu0
        %v1103 = vadd.f32 0.0, %v1102
        %v1104 = vpop.f32.mrb[0].mxu0
        %v1105 = vadd.f32 0.0, %v1104
        %1106 = vmatprep.mubr.f32.mxu0 0.0
        %1107 = vmatmul.mubr.f32.gmra.mrb[0].mxu0 %v954
        %v1108 = vpop.f32.mrb[0].mxu0
        %v1109 = vadd.f32 0.0, %v1108
        %v1110 = vpop.f32.mrb[0].mxu0
        %v1111 = vadd.f32 0.0, %v1110
        %1112 = vmatprep.mubr.f32.mxu0 0.0
        %1113 = vmatmul.mubr.f32.gmra.mrb[0].mxu0 %v955
        %v1114 = vpop.f32.mrb[0].mxu0
        %v1115 = vadd.f32 0.0, %v1114
        %v1116 = vpop.f32.mrb[0].mxu0
        %v1117 = vadd.f32 0.0, %v1116
        %1118 = vmatprep.mubr.f32.mxu0 0.0
        %1119 = vmatmul.mubr.f32.gmra.mrb[0].mxu0 %v956
        %v1120 = vpop.f32.mrb[0].mxu0
        %v1121 = vadd.f32 0.0, %v1120
        %v1122 = vpop.f32.mrb[0].mxu0
        %v1123 = vadd.f32 0.0, %v1122
        %1124 = vmatprep.mubr.f32.mxu0 0.0
        %1125 = vmatmul.mubr.f32.gmra.mrb[0].mxu0 %v957
        %v1126 = vpop.f32.mrb[0].mxu0
        %v1127 = vadd.f32 0.0, %v1126
        %v1128 = vpop.f32.mrb[0].mxu0
        %v1129 = vadd.f32 0.0, %v1128
        %1130 = vmatprep.mubr.f32.mxu0 0.0
        %1131 = vmatmul.mubr.f32.gmra.mrb[0].mxu0 %v958
        %v1132 = vpop.f32.mrb[0].mxu0
        %v1133 = vadd.f32 0.0, %v1132
        %v1134 = vpop.f32.mrb[0].mxu0
        %v1135 = vadd.f32 0.0, %v1134
        %1136 = vmatprep.mubr.f32.mxu0 0.0
        %1137 = vmatmul.mubr.f32.gmra.mrb[0].mxu0 %v959
        %v1138 = vpop.f32.mrb[0].mxu0
        %v1139 = vadd.f32 0.0, %v1138
        %v1140 = vpop.f32.mrb[0].mxu0
        %v1141 = vadd.f32 0.0, %v1140
        %1142 = vmatprep.mubr.f32.mxu0 0.0
        %1143 = vmatmul.mubr.f32.gmra.mrb[0].mxu0 %v960
        %v1144 = vpop.f32.mrb[0].mxu0
        %v1145 = vadd.f32 0.0, %v1144
        %v1146 = vpop.f32.mrb[0].mxu0
        %v1147 = vadd.f32 0.0, %v1146
        %1148 = vmatprep.mubr.f32.mxu0 0.0
        %1149 = vmatmul.mubr.f32.gmra.mrb[0].mxu0 %v961
        %v1150 = vpop.f32.mrb[0].mxu0
        %v1151 = vadd.f32 0.0, %v1150
        %v1152 = vpop.f32.mrb[0].mxu0
        %v1153 = vadd.f32 0.0, %v1152
        %1154 = vmatprep.mubr.f32.mxu0 0.0
        %1155 = vmatmul.mubr.f32.gmra.mrb[0].mxu0 %v962
        %v1156 = vpop.f32.mrb[0].mxu0
        %v1157 = vadd.f32 0.0, %v1156
        %v1158 = vpop.f32.mrb[0].mxu0
        %v1159 = vadd.f32 0.0, %v1158
        %1160 = vmatprep.mubr.f32.mxu0 0.0
        %1161 = vmatmul.mubr.f32.gmra.mrb[0].mxu0 %v963
        %v1162 = vpop.f32.mrb[0].mxu0
        %v1163 = vadd.f32 0.0, %v1162
        %v1164 = vpop.f32.mrb[0].mxu0
        %v1165 = vadd.f32 0.0, %v1164
        %1166 = vmatprep.mubr.f32.mxu0 0.0
        %1167 = vmatmul.mubr.f32.gmra.mrb[0].mxu0 %v964
        %v1168 = vpop.f32.mrb[0].mxu0
        %v1169 = vadd.f32 0.0, %v1168
        %v1170 = vpop.f32.mrb[0].mxu0
        %v1171 = vadd.f32 0.0, %v1170
        %1172 = vmatprep.mubr.f32.mxu0 0.0
        %1173 = vmatmul.mubr.f32.gmra.mrb[0].mxu0 %v965
        %v1174 = vpop.f32.mrb[0].mxu0
        %v1175 = vadd.f32 0.0, %v1174
        %v1176 = vpop.f32.mrb[0].mxu0
        %v1177 = vadd.f32 0.0, %v1176
        %1178 = vmatprep.mubr.f32.mxu0 0.0
        %1179 = vmatmul.mubr.f32.gmra.mrb[0].mxu0 %v966
        %v1180 = vpop.f32.mrb[0].mxu0
        %v1181 = vadd.f32 0.0, %v1180
        %v1182 = vpop.f32.mrb[0].mxu0
        %v1183 = vadd.f32 0.0, %v1182
        %1184 = vmatprep.mubr.f32.mxu0 0.0
        %1185 = vmatmul.mubr.f32.gmra.mrb[0].mxu0 %v967
        %v1186 = vpop.f32.mrb[0].mxu0
        %v1187 = vadd.f32 0.0, %v1186
        %v1188 = vpop.f32.mrb[0].mxu0
        %v1189 = vadd.f32 0.0, %v1188
        %1190 = vmatprep.mubr.f32.mxu0 0.0
        %1191 = vmatmul.mubr.f32.gmra.mrb[0].mxu0 %v968
        %v1192 = vpop.f32.mrb[0].mxu0
        %v1193 = vadd.f32 0.0, %v1192
        %v1194 = vpop.f32.mrb[0].mxu0
        %v1195 = vadd.f32 0.0, %v1194
        %1196 = vmatprep.mubr.f32.mxu0 0.0
        %1197 = vmatmul.mubr.f32.gmra.mrb[0].mxu0 %v969
        %v1198 = vpop.f32.mrb[0].mxu0
        %v1199 = vadd.f32 0.0, %v1198
        %v1200 = vpop.f32.mrb[0].mxu0
        %v1201 = vadd.f32 0.0, %v1200
        %1202 = vmatprep.mubr.f32.mxu0 0.0
        %1203 = vmatmul.mubr.f32.gmra.mrb[0].mxu0 %v970
        %v1204 = vpop.f32.mrb[0].mxu0
        %v1205 = vadd.f32 0.0, %v1204
        %v1206 = vpop.f32.mrb[0].mxu0
        %v1207 = vadd.f32 0.0, %v1206
        %1208 = vmatprep.mubr.f32.mxu0 0.0
        %1209 = vmatmul.mubr.f32.gmra.mrb[0].mxu0 %v971
        %v1210 = vpop.f32.mrb[0].mxu0
        %v1211 = vadd.f32 0.0, %v1210
        %v1212 = vpop.f32.mrb[0].mxu0
        %v1213 = vadd.f32 0.0, %v1212
        %1214 = vmatprep.mubr.f32.mxu0 0.0
        %1215 = vmatmul.mubr.f32.gmra.mrb[0].mxu0 %v972
        %v1216 = vpop.f32.mrb[0].mxu0
        %v1217 = vadd.f32 0.0, %v1216
        %v1218 = vpop.f32.mrb[0].mxu0
        %v1219 = vadd.f32 0.0, %v1218
        %1220 = vmatprep.mubr.f32.mxu0 0.0
        %1221 = vmatmul.mubr.f32.gmra.mrb[0].mxu0 %v973
        %v1222 = vpop.f32.mrb[0].mxu0
        %v1223 = vadd.f32 0.0, %v1222
        %v1224 = vpop.f32.mrb[0].mxu0
        %v1225 = vadd.f32 0.0, %v1224
        %1226 = vdwg.mxu0
        %v1227 = vld [vmem:[%s3] sm:$0x1]
        %v1229 = vlaneseq
        %v1230 = vshrl.u32 %v1229, 7
        %v1231 = vsub.s32 0, %v1230
        %v1232 = vrot.slane %v1227, %v1231
        %v1234 = vadd.f32 %v1073, %v1232
        %v1235 = vadd.f32 %v1079, %v1232
        %v1236 = vadd.f32 %v1085, %v1232
        %v1237 = vadd.f32 %v1091, %v1232
        %v1238 = vadd.f32 %v1097, %v1232
        %v1239 = vadd.f32 %v1103, %v1232
        %v1240 = vadd.f32 %v1109, %v1232
        %v1241 = vadd.f32 %v1115, %v1232
        %v1242 = vadd.f32 %v1121, %v1232
        %v1243 = vadd.f32 %v1127, %v1232
        %v1244 = vadd.f32 %v1133, %v1232
        %v1245 = vadd.f32 %v1139, %v1232
        %v1246 = vadd.f32 %v1145, %v1232
        %v1247 = vadd.f32 %v1151, %v1232
        %v1248 = vadd.f32 %v1157, %v1232
        %v1249 = vadd.f32 %v1163, %v1232
        %v1250 = vadd.f32 %v1169, %v1232
        %v1251 = vadd.f32 %v1175, %v1232
        %v1252 = vadd.f32 %v1181, %v1232
        %v1253 = vadd.f32 %v1187, %v1232
        %v1254 = vadd.f32 %v1193, %v1232
        %v1255 = vadd.f32 %v1199, %v1232
        %v1256 = vadd.f32 %v1205, %v1232
        %v1257 = vadd.f32 %v1211, %v1232
        %v1258 = vadd.f32 %v1217, %v1232
        %v1259 = vadd.f32 %v1223, %v1232
        %v1260 = vxor.u32 %v1234, 2147483648
        %v1261 = vxor.u32 %v1235, 2147483648
        %v1262 = vxor.u32 %v1236, 2147483648
        %v1263 = vxor.u32 %v1237, 2147483648
        %v1264 = vxor.u32 %v1238, 2147483648
        %v1265 = vxor.u32 %v1239, 2147483648
        %v1266 = vxor.u32 %v1240, 2147483648
        %v1267 = vxor.u32 %v1241, 2147483648
        %v1268 = vxor.u32 %v1242, 2147483648
        %v1269 = vxor.u32 %v1243, 2147483648
        %v1270 = vxor.u32 %v1244, 2147483648
        %v1271 = vxor.u32 %v1245, 2147483648
        %v1272 = vxor.u32 %v1246, 2147483648
        %v1273 = vxor.u32 %v1247, 2147483648
        %v1274 = vxor.u32 %v1248, 2147483648
        %v1275 = vxor.u32 %v1249, 2147483648
        %v1276 = vxor.u32 %v1250, 2147483648
        %v1277 = vxor.u32 %v1251, 2147483648
        %v1278 = vxor.u32 %v1252, 2147483648
        %v1279 = vxor.u32 %v1253, 2147483648
        %v1280 = vxor.u32 %v1254, 2147483648
        %v1281 = vxor.u32 %v1255, 2147483648
        %v1282 = vxor.u32 %v1256, 2147483648
        %v1283 = vxor.u32 %v1257, 2147483648
        %v1284 = vxor.u32 %v1258, 2147483648
        %v1285 = vxor.u32 %v1259, 2147483648
        %v1286 = vmul.f32 %v1260, 1.442695
        %v1287 = vpow.pop %v1286
        %v1288 = vmul.f32 %v1261, 1.442695
        %v1289 = vpow.pop %v1288
        %v1290 = vmul.f32 %v1262, 1.442695
        %v1291 = vpow.pop %v1290
        %v1292 = vmul.f32 %v1263, 1.442695
        %v1293 = vpow.pop %v1292
        %v1294 = vmul.f32 %v1264, 1.442695
        %v1295 = vpow.pop %v1294
        %v1296 = vmul.f32 %v1265, 1.442695
        %v1297 = vpow.pop %v1296
        %v1298 = vmul.f32 %v1266, 1.442695
        %v1299 = vpow.pop %v1298
        %v1300 = vmul.f32 %v1267, 1.442695
        %v1301 = vpow.pop %v1300
        %v1302 = vmul.f32 %v1268, 1.442695
        %v1303 = vpow.pop %v1302
        %v1304 = vmul.f32 %v1269, 1.442695
        %v1305 = vpow.pop %v1304
        %v1306 = vmul.f32 %v1270, 1.442695
        %v1307 = vpow.pop %v1306
        %v1308 = vmul.f32 %v1271, 1.442695
        %v1309 = vpow.pop %v1308
        %v1310 = vmul.f32 %v1272, 1.442695
        %v1311 = vpow.pop %v1310
        %v1312 = vmul.f32 %v1273, 1.442695
        %v1313 = vpow.pop %v1312
        %v1314 = vmul.f32 %v1274, 1.442695
        %v1315 = vpow.pop %v1314
        %v1316 = vmul.f32 %v1275, 1.442695
        %v1317 = vpow.pop %v1316
        %v1318 = vmul.f32 %v1276, 1.442695
        %v1319 = vpow.pop %v1318
        %v1320 = vmul.f32 %v1277, 1.442695
        %v1321 = vpow.pop %v1320
        %v1322 = vmul.f32 %v1278, 1.442695
        %v1323 = vpow.pop %v1322
        %v1324 = vmul.f32 %v1279, 1.442695
        %v1325 = vpow.pop %v1324
        %v1326 = vmul.f32 %v1280, 1.442695
        %v1327 = vpow.pop %v1326
        %v1328 = vmul.f32 %v1281, 1.442695
        %v1329 = vpow.pop %v1328
        %v1330 = vmul.f32 %v1282, 1.442695
        %v1331 = vpow.pop %v1330
        %v1332 = vmul.f32 %v1283, 1.442695
        %v1333 = vpow.pop %v1332
        %v1334 = vmul.f32 %v1284, 1.442695
        %v1335 = vpow.pop %v1334
        %v1336 = vmul.f32 %v1285, 1.442695
        %v1337 = vpow.pop %v1336
        %v1338 = vadd.f32 %v1287, 1.0
        %v1339 = vadd.f32 %v1289, 1.0
        %v1340 = vadd.f32 %v1291, 1.0
        %v1341 = vadd.f32 %v1293, 1.0
        %v1342 = vadd.f32 %v1295, 1.0
        %v1343 = vadd.f32 %v1297, 1.0
        %v1344 = vadd.f32 %v1299, 1.0
        %v1345 = vadd.f32 %v1301, 1.0
        %v1346 = vadd.f32 %v1303, 1.0
        %v1347 = vadd.f32 %v1305, 1.0
        %v1348 = vadd.f32 %v1307, 1.0
        %v1349 = vadd.f32 %v1309, 1.0
        %v1350 = vadd.f32 %v1311, 1.0
        %v1351 = vadd.f32 %v1313, 1.0
        %v1352 = vadd.f32 %v1315, 1.0
        %v1353 = vadd.f32 %v1317, 1.0
        %v1354 = vadd.f32 %v1319, 1.0
        %v1355 = vadd.f32 %v1321, 1.0
        %v1356 = vadd.f32 %v1323, 1.0
        %v1357 = vadd.f32 %v1325, 1.0
        %v1358 = vadd.f32 %v1327, 1.0
        %v1359 = vadd.f32 %v1329, 1.0
        %v1360 = vadd.f32 %v1331, 1.0
        %v1361 = vadd.f32 %v1333, 1.0
        %v1362 = vadd.f32 %v1335, 1.0
        %v1363 = vadd.f32 %v1337, 1.0
        %v1364 = vrcp.pop %v1338
        %v1365 = vmul.f32 1.0, %v1364
        %v1366 = vrcp.pop %v1339
        %v1367 = vmul.f32 1.0, %v1366
        %v1368 = vrcp.pop %v1340
        %v1369 = vmul.f32 1.0, %v1368
        %v1370 = vrcp.pop %v1341
        %v1371 = vmul.f32 1.0, %v1370
        %v1372 = vrcp.pop %v1342
        %v1373 = vmul.f32 1.0, %v1372
        %v1374 = vrcp.pop %v1343
        %v1375 = vmul.f32 1.0, %v1374
        %v1376 = vrcp.pop %v1344
        %v1377 = vmul.f32 1.0, %v1376
        %v1378 = vrcp.pop %v1345
        %v1379 = vmul.f32 1.0, %v1378
        %v1380 = vrcp.pop %v1346
        %v1381 = vmul.f32 1.0, %v1380
        %v1382 = vrcp.pop %v1347
        %v1383 = vmul.f32 1.0, %v1382
        %v1384 = vrcp.pop %v1348
        %v1385 = vmul.f32 1.0, %v1384
        %v1386 = vrcp.pop %v1349
        %v1387 = vmul.f32 1.0, %v1386
        %v1388 = vrcp.pop %v1350
        %v1389 = vmul.f32 1.0, %v1388
        %v1390 = vrcp.pop %v1351
        %v1391 = vmul.f32 1.0, %v1390
        %v1392 = vrcp.pop %v1352
        %v1393 = vmul.f32 1.0, %v1392
        %v1394 = vrcp.pop %v1353
        %v1395 = vmul.f32 1.0, %v1394
        %v1396 = vrcp.pop %v1354
        %v1397 = vmul.f32 1.0, %v1396
        %v1398 = vrcp.pop %v1355
        %v1399 = vmul.f32 1.0, %v1398
        %v1400 = vrcp.pop %v1356
        %v1401 = vmul.f32 1.0, %v1400
        %v1402 = vrcp.pop %v1357
        %v1403 = vmul.f32 1.0, %v1402
        %v1404 = vrcp.pop %v1358
        %v1405 = vmul.f32 1.0, %v1404
        %v1406 = vrcp.pop %v1359
        %v1407 = vmul.f32 1.0, %v1406
        %v1408 = vrcp.pop %v1360
        %v1409 = vmul.f32 1.0, %v1408
        %v1410 = vrcp.pop %v1361
        %v1411 = vmul.f32 1.0, %v1410
        %v1412 = vrcp.pop %v1362
        %v1413 = vmul.f32 1.0, %v1412
        %v1414 = vrcp.pop %v1363
        %v1415 = vmul.f32 1.0, %v1414
        %v1416 = vmul.f32 %v1365, %v662
        %v1417 = vmul.f32 %v1367, %v663
        %v1418 = vmul.f32 %v1369, %v664
        %v1419 = vmul.f32 %v1371, %v665
        %v1420 = vmul.f32 %v1373, %v666
        %v1421 = vmul.f32 %v1375, %v667
        %v1422 = vmul.f32 %v1377, %v668
        %v1423 = vmul.f32 %v1379, %v669
        %v1424 = vmul.f32 %v1381, %v670
        %v1425 = vmul.f32 %v1383, %v671
        %v1426 = vmul.f32 %v1385, %v672
        %v1427 = vmul.f32 %v1387, %v673
        %v1428 = vmul.f32 %v1389, %v674
        %v1429 = vmul.f32 %v1391, %v675
        %v1430 = vmul.f32 %v1393, %v676
        %v1431 = vmul.f32 %v1395, %v677
        %v1432 = vmul.f32 %v1397, %v678
        %v1433 = vmul.f32 %v1399, %v679
        %v1434 = vmul.f32 %v1401, %v680
        %v1435 = vmul.f32 %v1403, %v681
        %v1436 = vmul.f32 %v1405, %v682
        %v1437 = vmul.f32 %v1407, %v683
        %v1438 = vmul.f32 %v1409, %v684
        %v1439 = vmul.f32 %v1411, %v685
        %v1440 = vmul.f32 %v1413, %v686
        %v1441 = vmul.f32 %v1415, %v687
        %v1442 = vadd.f32 %v1416, %v1075
        %v1443 = vadd.f32 %v1417, %v1081
        %v1444 = vadd.f32 %v1418, %v1087
        %v1445 = vadd.f32 %v1419, %v1093
        %v1446 = vadd.f32 %v1420, %v1099
        %v1447 = vadd.f32 %v1421, %v1105
        %v1448 = vadd.f32 %v1422, %v1111
        %v1449 = vadd.f32 %v1423, %v1117
        %v1450 = vadd.f32 %v1424, %v1123
        %v1451 = vadd.f32 %v1425, %v1129
        %v1452 = vadd.f32 %v1426, %v1135
        %v1453 = vadd.f32 %v1427, %v1141
        %v1454 = vadd.f32 %v1428, %v1147
        %v1455 = vadd.f32 %v1429, %v1153
        %v1456 = vadd.f32 %v1430, %v1159
        %v1457 = vadd.f32 %v1431, %v1165
        %v1458 = vadd.f32 %v1432, %v1171
        %v1459 = vadd.f32 %v1433, %v1177
        %v1460 = vadd.f32 %v1434, %v1183
        %v1461 = vadd.f32 %v1435, %v1189
        %v1462 = vadd.f32 %v1436, %v1195
        %v1463 = vadd.f32 %v1437, %v1201
        %v1464 = vadd.f32 %v1438, %v1207
        %v1465 = vadd.f32 %v1439, %v1213
        %v1466 = vadd.f32 %v1440, %v1219
        %v1467 = vadd.f32 %v1441, %v1225
        %v1468 = vpack.c.bf16 %v1443, %v1442
        %v1469 = vpack.c.bf16 %v1445, %v1444
        %v1470 = vpack.c.bf16 %v1447, %v1446
        %v1471 = vpack.c.bf16 %v1449, %v1448
        %v1472 = vpack.c.bf16 %v1451, %v1450
        %v1473 = vpack.c.bf16 %v1453, %v1452
        %v1474 = vpack.c.bf16 %v1455, %v1454
        %v1475 = vpack.c.bf16 %v1457, %v1456
        %v1476 = vpack.c.bf16 %v1459, %v1458
        %v1477 = vpack.c.bf16 %v1461, %v1460
        %v1478 = vpack.c.bf16 %v1463, %v1462
        %v1479 = vpack.c.bf16 %v1465, %v1464
        %v1480 = vpack.c.bf16 %v1467, %v1466
        %v1494 = vunpack.c.l.b16 %v1468
        %v1495 = vunpack.c.h.b16 %v1468
        %v1496 = vunpack.c.l.b16 %v1469
        %v1497 = vunpack.c.h.b16 %v1469
        %v1498 = vunpack.c.l.b16 %v1470
        %v1499 = vunpack.c.h.b16 %v1470
        %v1500 = vunpack.c.l.b16 %v1471
        %v1501 = vunpack.c.h.b16 %v1471
        %v1502 = vunpack.c.l.b16 %v1472
        %v1503 = vunpack.c.h.b16 %v1472
        %v1504 = vunpack.c.l.b16 %v1473
        %v1505 = vunpack.c.h.b16 %v1473
        %v1506 = vunpack.c.l.b16 %v1474
        %v1507 = vunpack.c.h.b16 %v1474
        %v1508 = vunpack.c.l.b16 %v1475
        %v1509 = vunpack.c.h.b16 %v1475
        %v1510 = vunpack.c.l.b16 %v1476
        %v1511 = vunpack.c.h.b16 %v1476
        %v1512 = vunpack.c.l.b16 %v1477
        %v1513 = vunpack.c.h.b16 %v1477
        %v1514 = vunpack.c.l.b16 %v1478
        %v1515 = vunpack.c.h.b16 %v1478
        %v1516 = vunpack.c.l.b16 %v1479
        %v1517 = vunpack.c.h.b16 %v1479
        %v1518 = vunpack.c.l.b16 %v1480
        %v1519 = vunpack.c.h.b16 %v1480
        %v1520 = vpack.c.b16 %v1494, %v1494
        %v1521 = vpack.c.b16 %v1495, %v1495
        %v1522 = vpack.c.b16 %v1496, %v1496
        %v1523 = vpack.c.b16 %v1497, %v1497
        %v1524 = vpack.c.b16 %v1498, %v1498
        %v1525 = vpack.c.b16 %v1499, %v1499
        %v1526 = vpack.c.b16 %v1500, %v1500
        %v1527 = vpack.c.b16 %v1501, %v1501
        %v1528 = vpack.c.b16 %v1502, %v1502
        %v1529 = vpack.c.b16 %v1503, %v1503
        %v1530 = vpack.c.b16 %v1504, %v1504
        %v1531 = vpack.c.b16 %v1505, %v1505
        %v1532 = vpack.c.b16 %v1506, %v1506
        %v1533 = vpack.c.b16 %v1507, %v1507
        %v1534 = vpack.c.b16 %v1508, %v1508
        %v1535 = vpack.c.b16 %v1509, %v1509
        %v1536 = vpack.c.b16 %v1510, %v1510
        %v1537 = vpack.c.b16 %v1511, %v1511
        %v1538 = vpack.c.b16 %v1512, %v1512
        %v1539 = vpack.c.b16 %v1513, %v1513
        %v1540 = vpack.c.b16 %v1514, %v1514
        %v1541 = vpack.c.b16 %v1515, %v1515
        %v1542 = vpack.c.b16 %v1516, %v1516
        %v1543 = vpack.c.b16 %v1517, %v1517
        %v1544 = vpack.c.b16 %v1518, %v1518
        %v1545 = vpack.c.b16 %v1519, %v1519
        %1572 = vst [vmem:[%s281] sm:$0xf] %v1520
        %1573 = vst [vmem:[%s281 + $0x4] sm:$0xf] %v1521
        %1574 = vst [vmem:[%s281 + $0x8] sm:$0xf] %v1522
        %1575 = vst [vmem:[%s281 + $0xc] sm:$0xf] %v1523
        %1576 = vst [vmem:[%s281 + $0x10] sm:$0xf] %v1524
        %1577 = vst [vmem:[%s281 + $0x14] sm:$0xf] %v1525
        %1578 = vst [vmem:[%s281 + $0x18] sm:$0xf] %v1526
        %1579 = vst [vmem:[%s281 + $0x1c] sm:$0xf] %v1527
        %1580 = vst [vmem:[%s281 + $0x20] sm:$0xf] %v1528
        %1581 = vst [vmem:[%s281 + $0x24] sm:$0xf] %v1529
        %1582 = vst [vmem:[%s281 + $0x28] sm:$0xf] %v1530
        %1583 = vst [vmem:[%s281 + $0x2c] sm:$0xf] %v1531
        %1584 = vst [vmem:[%s281 + $0x30] sm:$0xf] %v1532
        %1585 = vst [vmem:[%s281 + $0x34] sm:$0xf] %v1533
        %1586 = vst [vmem:[%s281 + $0x38] sm:$0xf] %v1534
        %1587 = vst [vmem:[%s281 + $0x3c] sm:$0xf] %v1535
        %1588 = vst [vmem:[%s281 + $0x40] sm:$0xf] %v1536
        %1589 = vst [vmem:[%s281 + $0x44] sm:$0xf] %v1537
        %1590 = vst [vmem:[%s281 + $0x48] sm:$0xf] %v1538
        %1591 = vst [vmem:[%s281 + $0x4c] sm:$0xf] %v1539
        %1592 = vst [vmem:[%s281 + $0x50] sm:$0xf] %v1540
        %1593 = vst [vmem:[%s281 + $0x54] sm:$0xf] %v1541
        %1594 = vst [vmem:[%s281 + $0x58] sm:$0xf] %v1542
        %1595 = vst [vmem:[%s281 + $0x5c] sm:$0xf] %v1543
        %1596 = vst [vmem:[%s281 + $0x60] sm:$0xf] %v1544
        %1597 = vst [vmem:[%s281 + $0x64] sm:$0xf] %v1545
        %s1598 = sand.u32 %s126, 1
        %s1599 = scalar_lea.sflag [#allocation4], %s1598
        %s1600 = sand.u32 %s126, 1
        %s1601 = smul.addr %s1600, 104
        %s1602 = scalar_lea.vmem [#allocation8], %s1601
        // Predicated region
        $region49: #{tpu_custom_call.1} parent=35 // pred_check
          %p1603 = pneg %p136
        $region50: #{tpu_custom_call.1} parent=35 // pred_check_branch
          %1605 = sbr.rel (%p1603) target = $region52
        $region51: #{tpu_custom_call.1} parent=35 // pred_region
          %s1606 = smul.u32 26, %s24
          %s1607 = ssub.s32 50, %s1606
          %p1608 = scmp.lt.s32.totalorder %s1607, 26
          %s1609 = scalar_select %p1608, %s1607, 26
          %s1610 = smul.u32 64, %s1609
          %s1612 = ssub.s32 1664, %s1610
          %1613 = vsyncadd %s1599, %s1612
          %p1614 = scmp.ne.s32.totalorder 0, %s1610
          %s1615 = smul.addr %s1606, 64
          %s1616 = scalar_lea.hbm %s4, %s1615
          %s1617 = smul.u32 4, %s1609
          %s1618 = sshll.u32 %s1602, 4
          %s1619 = int_to_ptr.vmem [resolvable:$true] %s1618
          %s1620 = sshll.u32 %s1617, 4
          %1624 = dma.vmem_to_hbm [thread:$0]  (%p1614), %s1619, %s1620, %s1616, %s1599, 64, 64, 4
        $region52: #{tpu_custom_call.1} parent=35 // pred_fallthru
          _
      $region36: #{tpu_custom_call.1} parent=5 // pred_fallthru
        _
      %p1625 = scmp.le.s32.totalorder 2, %s19
      // Predicated region
      $region53: #{tpu_custom_call.1} parent=5 // pred_check
        %p1626 = pneg %p1625
      $region54: #{tpu_custom_call.1} parent=5 // pred_check_branch
        %1628 = sbr.rel (%p1626) target = $region56
      $region55: #{tpu_custom_call.1} parent=5 // pred_region
        %s1629 = ssub.s32 %s19, 2
        // Predicated region
        $region57: #{tpu_custom_call.1} parent=55 // pred_check
          %p1630 = pneg %p142
        $region58: #{tpu_custom_call.1} parent=55 // pred_check_branch
          %1632 = sbr.rel (%p1630) target = $region60
        $region59: #{tpu_custom_call.1} parent=55 // pred_region
          %s1633 = sand.u32 %s127, 1
          %s1634 = scalar_lea.sflag [#allocation4], %s1633
          %s1635 = sand.u32 %s127, 1
          %s1636 = smul.addr %s1635, 104
          %s1637 = scalar_lea.vmem [#allocation8], %s1636
          %1638 = dma.done %s1634, 1664
        $region60: #{tpu_custom_call.1} parent=55 // pred_fallthru
          _
      $region56: #{tpu_custom_call.1} parent=5 // pred_fallthru
        _
    $region6: #{tpu_custom_call.1} parent=1 // loop_footer
      %s23 = sadd.s32 1, %s19
    $region7: #{tpu_custom_call.1} parent=1 // loop_footer_branch
      %18 = sbr.rel target = $region3
    $region8: #{tpu_custom_call.1} parent=1 // loop_exit
      _
    %1639 = vsyncpa [#allocation3], 1
    %s1640 = scalar_lea.sflag [#allocation3], 1
    %1641 = vsyncpa %s1640, 1
    %1642 = vsyncpa [#allocation6], 1
    %s1643 = scalar_lea.sflag [#allocation6], 1
    %1644 = vsyncpa %s1643, 1
    %1645 = vsyncpa [#allocation4], 1
    %s1646 = scalar_lea.sflag [#allocation4], 1
    %1647 = vsyncpa %s1646, 1

</llo_original>
